<compile_context>
chip_gen: v5e
topology: v5e:2x2
jax: 0.10.0
libtpu: 0.0.40
codegen_flags: <defaults>
</compile_context>

<pallas_src>
import functools

import jax
import jax.numpy as jnp
from jax.experimental import pallas as pl
from jax.experimental.pallas import tpu as pltpu


def _disc_kernel(x_ref, w1_ref, b1_ref, w2_ref, b2_ref, w3r_ref, b3_ref,
                 out_ref, *, beta, thr, num_steps):
    """One batch block; whole time recurrence unrolled inside the kernel."""
    Bb = out_ref.shape[0]
    H1 = w1_ref.shape[1]
    H2 = w2_ref.shape[1]

    # Hoist weight loads out of the (unrolled) time loop.
    w1 = w1_ref[...]          # (D_in, H1)   (reward_scale pre-folded)
    b1 = b1_ref[...]          # (1, H1)
    w2 = w2_ref[...]          # (H1, H2)
    b2 = b2_ref[...]          # (1, H2)
    w3r = w3r_ref[...]        # (1, H2)      fc3 weight as a row vector
    b3 = b3_ref[...]          # (1, 1)

    m1 = jnp.zeros((Bb, H1), jnp.float32)
    m2 = jnp.zeros((Bb, H2), jnp.float32)
    m3 = jnp.zeros((Bb, 1), jnp.float32)

    # Static Python loop == fully unrolled recurrence (T is small/static);
    # gives the LLO scheduler full visibility and keeps all slices static.
    for t in range(num_steps):
        xt = x_ref[:, t, :]                               # (Bb, D_in)

        # --- layer 1: fc1 (scale folded) -> relu -> lif1 -------------------
        cur1 = jnp.maximum(
            jnp.dot(xt, w1, preferred_element_type=jnp.float32) + b1, 0.0)
        reset1 = (m1 > thr).astype(jnp.float32)
        m1 = beta * m1 + cur1 - reset1 * thr
        spk1 = (m1 > thr).astype(jnp.float32)

        # --- layer 2: fc2 (scale folded) -> relu -> lif2 -------------------
        cur2 = jnp.maximum(
            jnp.dot(spk1, w2, preferred_element_type=jnp.float32) + b2, 0.0)
        reset2 = (m2 > thr).astype(jnp.float32)
        m2 = beta * m2 + cur2 - reset2 * thr
        spk2 = (m2 > thr).astype(jnp.float32)

        # --- layer 3: N=1 output -> VPU multiply + lane reduce (no MXU) ----
        cur3 = jnp.maximum(
            jnp.sum(spk2 * w3r, axis=-1, keepdims=True) + b3, 0.0)
        reset3 = (m3 > thr).astype(jnp.float32)
        m3 = beta * m3 + cur3 - reset3 * thr

        # Record mem3 into the lane-dense (Bb, T) output (VMEM column store;
        # the HBM writeback happens once, densely, at the end of the grid step).
        out_ref[:, t:t + 1] = m3


def discriminator_forward(x, params, *, num_steps, beta=0.95, reward_scale=2.0,
                          threshold=1.0, b_block=8):
    """x: (B, T, D_in) as in the PyTorch module. Returns (B, T, 1)."""
    w1, b1, w2, b2, w3, b3 = params
    B, T, D_in = x.shape
    assert T == num_steps
    H1 = w1.shape[1]
    H2 = w2.shape[1]
    D_out = w3.shape[1]
    assert D_out == 1, "kernel assumes a single discriminator output"
    assert b_block % 8 == 0

    # Fold the constant reward_scale into the linear layers (exact:
    # relu(x @ (s*W) + s*b) == relu(s * (x @ W + b))).
    s = jnp.float32(reward_scale)
    w1s = (s * w1).astype(jnp.float32)
    b1s = (s * b1).astype(jnp.float32).reshape(1, H1)
    w2s = (s * w2).astype(jnp.float32)
    b2s = (s * b2).astype(jnp.float32).reshape(1, H2)
    w3r = (s * w3).astype(jnp.float32).reshape(1, H2)   # (H2,1) -> row (1,H2)
    b3s = (s * b3).astype(jnp.float32).reshape(1, 1)

    # Pad batch up to the sublane-aligned block size.
    B_pad = ((B + b_block - 1) // b_block) * b_block
    x_f = x.astype(jnp.float32)
    if B_pad != B:
        x_f = jnp.pad(x_f, ((0, B_pad - B), (0, 0), (0, 0)))
    n_b = B_pad // b_block

    kernel = functools.partial(_disc_kernel, beta=beta, thr=threshold,
                               num_steps=T)
    full = lambda i: (0, 0)

    out_bt = pl.pallas_call(
        kernel,
        out_shape=jax.ShapeDtypeStruct((B_pad, T), jnp.float32),
        grid_spec=pltpu.PrefetchScalarGridSpec(
            num_scalar_prefetch=0,
            grid=(n_b,),                                   # batch blocks only
            in_specs=[
                pl.BlockSpec((b_block, T, D_in), lambda i: (i, 0, 0)),  # x
                pl.BlockSpec((D_in, H1), full),                         # W1*s
                pl.BlockSpec((1, H1), full),                            # b1*s
                pl.BlockSpec((H1, H2), full),                           # W2*s
                pl.BlockSpec((1, H2), full),                            # b2*s
                pl.BlockSpec((1, H2), full),                            # W3*s row
                pl.BlockSpec((1, 1), full),                             # b3*s
            ],
            out_specs=pl.BlockSpec((b_block, T), lambda i: (i, 0)),
        ),
        compiler_params=pltpu.CompilerParams(
            dimension_semantics=("parallel",)),   # batch blocks independent
    )(x_f, w1s, b1s, w2s, b2s, w3r, b3s)

    return out_bt[:B].reshape(B, T, 1)


def reference_forward(x, params, *, num_steps, beta=0.95, reward_scale=2.0,
                      threshold=1.0):
    """Pure-JAX reference mirroring the PyTorch module exactly."""
    w1, b1, w2, b2, w3, b3 = params
    x_tbd = jnp.transpose(x, (1, 0, 2)).astype(jnp.float32)
    B = x.shape[0]

    def lif(mem, cur):
        reset = (mem > threshold).astype(jnp.float32)
        mem_new = beta * mem + cur - reset * threshold
        spk = (mem_new > threshold).astype(jnp.float32)
        return spk, mem_new

    def step(carry, xt):
        m1, m2, m3 = carry
        cur1 = jnp.maximum(reward_scale * (xt @ w1 + b1), 0.0)
        spk1, m1 = lif(m1, cur1)
        cur2 = jnp.maximum(reward_scale * (spk1 @ w2 + b2), 0.0)
        spk2, m2 = lif(m2, cur2)
        cur3 = jnp.maximum(reward_scale * (spk2 @ w3 + b3), 0.0)
        _, m3 = lif(m3, cur3)
        return (m1, m2, m3), m3

    init = (jnp.zeros((B, w1.shape[1]), jnp.float32),
            jnp.zeros((B, w2.shape[1]), jnp.float32),
            jnp.zeros((B, w3.shape[1]), jnp.float32))
    _, mem3_rec = jax.lax.scan(step, init, x_tbd)    # (T, B, 1)
    return jnp.transpose(mem3_rec, (1, 0, 2))


def init_params(key, d_in, h1, h2, d_out):
    """Deterministic init mimicking nn.Linear (uniform +/- 1/sqrt(fan_in))."""
    ks = jax.random.split(key, 6)

    def lin(kw, kb, fan_in, fan_out):
        bound = 1.0 / jnp.sqrt(fan_in)
        w = jax.random.uniform(kw, (fan_in, fan_out), jnp.float32, -bound, bound)
        b = jax.random.uniform(kb, (fan_out,), jnp.float32, -bound, bound)
        return w, b

    w1, b1 = lin(ks[0], ks[1], d_in, h1)
    w2, b2 = lin(ks[2], ks[3], h1, h2)
    w3, b3 = lin(ks[4], ks[5], h2, d_out)
    return (w1, b1, w2, b2, w3, b3)


if __name__ == "__main__":
    # Small shapes consistent with the module's forward.
    B, T = 4, 8                       # batch, num_steps
    D_IN, H1, H2, D_OUT = 64, 128, 64, 1
    BETA, REWARD_SCALE = 0.95, 2.0

    key = jax.random.PRNGKey(0)
    k_x, k_p = jax.random.split(key)
    x = jax.random.uniform(k_x, (B, T, D_IN), jnp.float32)   # (batch, steps, inputs)
    params = init_params(k_p, D_IN, H1, H2, D_OUT)

    out = discriminator_forward(x, params, num_steps=T, beta=BETA,
                                reward_scale=REWARD_SCALE)
    out = jax.block_until_ready(out)

    ref = jax.block_until_ready(
        reference_forward(x, params, num_steps=T, beta=BETA,
                          reward_scale=REWARD_SCALE))

    assert out.shape == (B, T, D_OUT), out.shape
    assert jnp.allclose(out, ref, atol=1e-4, rtol=1e-4), \
        f"max err {jnp.max(jnp.abs(out - ref))}"
    print("KERNEL_OK")
</pallas_src>

<mosaic_0001>
module attributes {stable_mosaic.version = 11 : i64} {
  func.func @_disc_kernel(%arg0: i32, %arg1: memref<8x8x64xf32, #tpu.memory_space<vmem>>, %arg2: memref<64x128xf32, #tpu.memory_space<vmem>>, %arg3: memref<1x128xf32, #tpu.memory_space<vmem>>, %arg4: memref<128x64xf32, #tpu.memory_space<vmem>>, %arg5: memref<1x64xf32, #tpu.memory_space<vmem>>, %arg6: memref<1x64xf32, #tpu.memory_space<vmem>>, %arg7: memref<1x1xf32, #tpu.memory_space<vmem>>, %arg8: memref<8x8xf32, #tpu.memory_space<vmem>>) attributes {dimension_semantics = [#tpu.dimension_semantics<parallel>], iteration_bounds = array<i64: 1>, scalar_prefetch = 0 : i64, scratch_operands = 0 : i64, tpu.core_type = #tpu.core_type<tc>, window_params = [{transform_indices = @transform_0, window_bounds = array<i64: 8, 8, 64>}, {pipeline_mode = #tpu.pipeline_mode<synchronous>, transform_indices = @transform_1, window_bounds = array<i64: 64, 128>}, {pipeline_mode = #tpu.pipeline_mode<synchronous>, transform_indices = @transform_2, window_bounds = array<i64: 1, 128>}, {pipeline_mode = #tpu.pipeline_mode<synchronous>, transform_indices = @transform_3, window_bounds = array<i64: 128, 64>}, {pipeline_mode = #tpu.pipeline_mode<synchronous>, transform_indices = @transform_4, window_bounds = array<i64: 1, 64>}, {pipeline_mode = #tpu.pipeline_mode<synchronous>, transform_indices = @transform_5, window_bounds = array<i64: 1, 64>}, {pipeline_mode = #tpu.pipeline_mode<synchronous>, transform_indices = @transform_6, window_bounds = array<i64: 1, 1>}, {transform_indices = @transform_7, window_bounds = array<i64: 8, 8>}]} {
    %c0 = arith.constant 0 : index
    %c0_0 = arith.constant 0 : index
    %0 = vector.load %arg2[%c0, %c0_0] : memref<64x128xf32, #tpu.memory_space<vmem>>, vector<64x128xf32>
    %c0_1 = arith.constant 0 : index
    %c0_2 = arith.constant 0 : index
    %1 = vector.load %arg3[%c0_1, %c0_2] : memref<1x128xf32, #tpu.memory_space<vmem>>, vector<1x128xf32>
    %c0_3 = arith.constant 0 : index
    %c0_4 = arith.constant 0 : index
    %2 = vector.load %arg4[%c0_3, %c0_4] : memref<128x64xf32, #tpu.memory_space<vmem>>, vector<128x64xf32>
    %c0_5 = arith.constant 0 : index
    %c0_6 = arith.constant 0 : index
    %3 = vector.load %arg5[%c0_5, %c0_6] : memref<1x64xf32, #tpu.memory_space<vmem>>, vector<1x64xf32>
    %c0_7 = arith.constant 0 : index
    %c0_8 = arith.constant 0 : index
    %4 = vector.load %arg6[%c0_7, %c0_8] : memref<1x64xf32, #tpu.memory_space<vmem>>, vector<1x64xf32>
    %c0_9 = arith.constant 0 : index
    %c0_10 = arith.constant 0 : index
    %5 = vector.load %arg7[%c0_9, %c0_10] : memref<1x1xf32, #tpu.memory_space<vmem>>, vector<1x1xf32>
    %cst = arith.constant 0.000000e+00 : f32
    %6 = vector.broadcast %cst : f32 to vector<8x128xf32>
    %cst_11 = arith.constant 0.000000e+00 : f32
    %7 = vector.broadcast %cst_11 : f32 to vector<8x64xf32>
    %cst_12 = arith.constant 0.000000e+00 : f32
    %8 = vector.broadcast %cst_12 : f32 to vector<8x1xf32>
    %c0_13 = arith.constant 0 : index
    %c0_14 = arith.constant 0 : index
    %c0_15 = arith.constant 0 : index
    %9 = vector.load %arg1[%c0_13, %c0_14, %c0_15] : memref<8x8x64xf32, #tpu.memory_space<vmem>>, vector<8x1x64xf32>
    %10 = vector.shape_cast %9 : vector<8x1x64xf32> to vector<8x64xf32>
    %cst_16 = arith.constant dense<0.000000e+00> : vector<8x128xf32>
    %11 = tpu.matmul %10, %0, %cst_16 {dimension_numbers = #tpu.dot_dimension_numbers<[1], [0], [0], [1], [0, 0, 1, 1], [], []>} : vector<8x64xf32>, vector<64x128xf32>, vector<8x128xf32> -> vector<8x128xf32>
    %12 = vector.broadcast %1 : vector<1x128xf32> to vector<8x128xf32>
    %13 = arith.addf %11, %12 : vector<8x128xf32>
    %cst_17 = arith.constant 0.000000e+00 : f32
    %14 = vector.broadcast %cst_17 : f32 to vector<8x128xf32>
    %15 = arith.maximumf %13, %14 : vector<8x128xf32>
    %cst_18 = arith.constant 1.000000e+00 : f32
    %16 = vector.broadcast %cst_18 : f32 to vector<8x128xf32>
    %17 = arith.cmpf ogt, %6, %16 : vector<8x128xf32>
    %18 = arith.extui %17 : vector<8x128xi1> to vector<8x128xi32>
    %19 = arith.sitofp %18 : vector<8x128xi32> to vector<8x128xf32>
    %cst_19 = arith.constant 0.949999988 : f32
    %20 = vector.broadcast %cst_19 : f32 to vector<8x128xf32>
    %21 = arith.mulf %20, %6 : vector<8x128xf32>
    %22 = arith.addf %21, %15 : vector<8x128xf32>
    %cst_20 = arith.constant 1.000000e+00 : f32
    %23 = vector.broadcast %cst_20 : f32 to vector<8x128xf32>
    %24 = arith.mulf %19, %23 : vector<8x128xf32>
    %25 = arith.subf %22, %24 : vector<8x128xf32>
    %cst_21 = arith.constant 1.000000e+00 : f32
    %26 = vector.broadcast %cst_21 : f32 to vector<8x128xf32>
    %27 = arith.cmpf ogt, %25, %26 : vector<8x128xf32>
    %28 = arith.extui %27 : vector<8x128xi1> to vector<8x128xi32>
    %29 = arith.sitofp %28 : vector<8x128xi32> to vector<8x128xf32>
    %cst_22 = arith.constant dense<0.000000e+00> : vector<8x64xf32>
    %30 = tpu.matmul %29, %2, %cst_22 {dimension_numbers = #tpu.dot_dimension_numbers<[1], [0], [0], [1], [0, 0, 1, 1], [], []>} : vector<8x128xf32>, vector<128x64xf32>, vector<8x64xf32> -> vector<8x64xf32>
    %31 = vector.broadcast %3 : vector<1x64xf32> to vector<8x64xf32>
    %32 = arith.addf %30, %31 : vector<8x64xf32>
    %cst_23 = arith.constant 0.000000e+00 : f32
    %33 = vector.broadcast %cst_23 : f32 to vector<8x64xf32>
    %34 = arith.maximumf %32, %33 : vector<8x64xf32>
    %cst_24 = arith.constant 1.000000e+00 : f32
    %35 = vector.broadcast %cst_24 : f32 to vector<8x64xf32>
    %36 = arith.cmpf ogt, %7, %35 : vector<8x64xf32>
    %37 = arith.extui %36 : vector<8x64xi1> to vector<8x64xi32>
    %38 = arith.sitofp %37 : vector<8x64xi32> to vector<8x64xf32>
    %cst_25 = arith.constant 0.949999988 : f32
    %39 = vector.broadcast %cst_25 : f32 to vector<8x64xf32>
    %40 = arith.mulf %39, %7 : vector<8x64xf32>
    %41 = arith.addf %40, %34 : vector<8x64xf32>
    %cst_26 = arith.constant 1.000000e+00 : f32
    %42 = vector.broadcast %cst_26 : f32 to vector<8x64xf32>
    %43 = arith.mulf %38, %42 : vector<8x64xf32>
    %44 = arith.subf %41, %43 : vector<8x64xf32>
    %cst_27 = arith.constant 1.000000e+00 : f32
    %45 = vector.broadcast %cst_27 : f32 to vector<8x64xf32>
    %46 = arith.cmpf ogt, %44, %45 : vector<8x64xf32>
    %47 = arith.extui %46 : vector<8x64xi1> to vector<8x64xi32>
    %48 = arith.sitofp %47 : vector<8x64xi32> to vector<8x64xf32>
    %49 = vector.broadcast %4 : vector<1x64xf32> to vector<8x64xf32>
    %50 = arith.mulf %48, %49 : vector<8x64xf32>
    %cst_28 = arith.constant dense<0.000000e+00> : vector<8xf32>
    %51 = vector.multi_reduction <add>, %50, %cst_28 [1] : vector<8x64xf32> to vector<8xf32>
    %52 = vector.shape_cast %51 : vector<8xf32> to vector<8x1xf32>
    %53 = vector.broadcast %5 : vector<1x1xf32> to vector<8x1xf32>
    %54 = arith.addf %52, %53 : vector<8x1xf32>
    %cst_29 = arith.constant 0.000000e+00 : f32
    %55 = vector.broadcast %cst_29 : f32 to vector<8x1xf32>
    %56 = arith.maximumf %54, %55 : vector<8x1xf32>
    %cst_30 = arith.constant 1.000000e+00 : f32
    %57 = vector.broadcast %cst_30 : f32 to vector<8x1xf32>
    %58 = arith.cmpf ogt, %8, %57 : vector<8x1xf32>
    %59 = arith.extui %58 : vector<8x1xi1> to vector<8x1xi32>
    %60 = arith.sitofp %59 : vector<8x1xi32> to vector<8x1xf32>
    %cst_31 = arith.constant 0.949999988 : f32
    %61 = vector.broadcast %cst_31 : f32 to vector<8x1xf32>
    %62 = arith.mulf %61, %8 : vector<8x1xf32>
    %63 = arith.addf %62, %56 : vector<8x1xf32>
    %cst_32 = arith.constant 1.000000e+00 : f32
    %64 = vector.broadcast %cst_32 : f32 to vector<8x1xf32>
    %65 = arith.mulf %60, %64 : vector<8x1xf32>
    %66 = arith.subf %63, %65 : vector<8x1xf32>
    %c0_33 = arith.constant 0 : index
    %c0_34 = arith.constant 0 : index
    %67 = vector.load %arg8[%c0_33, %c0_34] : memref<8x8xf32, #tpu.memory_space<vmem>>, vector<8x1xf32>
    tpu.vector_store %arg8[%c0_33, %c0_34], %66 {strides = array<i32>} : memref<8x8xf32, #tpu.memory_space<vmem>>, vector<8x1xf32>,
    %c0_35 = arith.constant 0 : index
    %c1 = arith.constant 1 : index
    %c0_36 = arith.constant 0 : index
    %68 = vector.load %arg1[%c0_35, %c1, %c0_36] : memref<8x8x64xf32, #tpu.memory_space<vmem>>, vector<8x1x64xf32>
    %69 = vector.shape_cast %68 : vector<8x1x64xf32> to vector<8x64xf32>
    %cst_37 = arith.constant dense<0.000000e+00> : vector<8x128xf32>
    %70 = tpu.matmul %69, %0, %cst_37 {dimension_numbers = #tpu.dot_dimension_numbers<[1], [0], [0], [1], [0, 0, 1, 1], [], []>} : vector<8x64xf32>, vector<64x128xf32>, vector<8x128xf32> -> vector<8x128xf32>
    %71 = vector.broadcast %1 : vector<1x128xf32> to vector<8x128xf32>
    %72 = arith.addf %70, %71 : vector<8x128xf32>
    %cst_38 = arith.constant 0.000000e+00 : f32
    %73 = vector.broadcast %cst_38 : f32 to vector<8x128xf32>
    %74 = arith.maximumf %72, %73 : vector<8x128xf32>
    %cst_39 = arith.constant 1.000000e+00 : f32
    %75 = vector.broadcast %cst_39 : f32 to vector<8x128xf32>
    %76 = arith.cmpf ogt, %25, %75 : vector<8x128xf32>
    %77 = arith.extui %76 : vector<8x128xi1> to vector<8x128xi32>
    %78 = arith.sitofp %77 : vector<8x128xi32> to vector<8x128xf32>
    %cst_40 = arith.constant 0.949999988 : f32
    %79 = vector.broadcast %cst_40 : f32 to vector<8x128xf32>
    %80 = arith.mulf %79, %25 : vector<8x128xf32>
    %81 = arith.addf %80, %74 : vector<8x128xf32>
    %cst_41 = arith.constant 1.000000e+00 : f32
    %82 = vector.broadcast %cst_41 : f32 to vector<8x128xf32>
    %83 = arith.mulf %78, %82 : vector<8x128xf32>
    %84 = arith.subf %81, %83 : vector<8x128xf32>
    %cst_42 = arith.constant 1.000000e+00 : f32
    %85 = vector.broadcast %cst_42 : f32 to vector<8x128xf32>
    %86 = arith.cmpf ogt, %84, %85 : vector<8x128xf32>
    %87 = arith.extui %86 : vector<8x128xi1> to vector<8x128xi32>
    %88 = arith.sitofp %87 : vector<8x128xi32> to vector<8x128xf32>
    %cst_43 = arith.constant dense<0.000000e+00> : vector<8x64xf32>
    %89 = tpu.matmul %88, %2, %cst_43 {dimension_numbers = #tpu.dot_dimension_numbers<[1], [0], [0], [1], [0, 0, 1, 1], [], []>} : vector<8x128xf32>, vector<128x64xf32>, vector<8x64xf32> -> vector<8x64xf32>
    %90 = vector.broadcast %3 : vector<1x64xf32> to vector<8x64xf32>
    %91 = arith.addf %89, %90 : vector<8x64xf32>
    %cst_44 = arith.constant 0.000000e+00 : f32
    %92 = vector.broadcast %cst_44 : f32 to vector<8x64xf32>
    %93 = arith.maximumf %91, %92 : vector<8x64xf32>
    %cst_45 = arith.constant 1.000000e+00 : f32
    %94 = vector.broadcast %cst_45 : f32 to vector<8x64xf32>
    %95 = arith.cmpf ogt, %44, %94 : vector<8x64xf32>
    %96 = arith.extui %95 : vector<8x64xi1> to vector<8x64xi32>
    %97 = arith.sitofp %96 : vector<8x64xi32> to vector<8x64xf32>
    %cst_46 = arith.constant 0.949999988 : f32
    %98 = vector.broadcast %cst_46 : f32 to vector<8x64xf32>
    %99 = arith.mulf %98, %44 : vector<8x64xf32>
    %100 = arith.addf %99, %93 : vector<8x64xf32>
    %cst_47 = arith.constant 1.000000e+00 : f32
    %101 = vector.broadcast %cst_47 : f32 to vector<8x64xf32>
    %102 = arith.mulf %97, %101 : vector<8x64xf32>
    %103 = arith.subf %100, %102 : vector<8x64xf32>
    %cst_48 = arith.constant 1.000000e+00 : f32
    %104 = vector.broadcast %cst_48 : f32 to vector<8x64xf32>
    %105 = arith.cmpf ogt, %103, %104 : vector<8x64xf32>
    %106 = arith.extui %105 : vector<8x64xi1> to vector<8x64xi32>
    %107 = arith.sitofp %106 : vector<8x64xi32> to vector<8x64xf32>
    %108 = vector.broadcast %4 : vector<1x64xf32> to vector<8x64xf32>
    %109 = arith.mulf %107, %108 : vector<8x64xf32>
    %cst_49 = arith.constant dense<0.000000e+00> : vector<8xf32>
    %110 = vector.multi_reduction <add>, %109, %cst_49 [1] : vector<8x64xf32> to vector<8xf32>
    %111 = vector.shape_cast %110 : vector<8xf32> to vector<8x1xf32>
    %112 = vector.broadcast %5 : vector<1x1xf32> to vector<8x1xf32>
    %113 = arith.addf %111, %112 : vector<8x1xf32>
    %cst_50 = arith.constant 0.000000e+00 : f32
    %114 = vector.broadcast %cst_50 : f32 to vector<8x1xf32>
    %115 = arith.maximumf %113, %114 : vector<8x1xf32>
    %cst_51 = arith.constant 1.000000e+00 : f32
    %116 = vector.broadcast %cst_51 : f32 to vector<8x1xf32>
    %117 = arith.cmpf ogt, %66, %116 : vector<8x1xf32>
    %118 = arith.extui %117 : vector<8x1xi1> to vector<8x1xi32>
    %119 = arith.sitofp %118 : vector<8x1xi32> to vector<8x1xf32>
    %cst_52 = arith.constant 0.949999988 : f32
    %120 = vector.broadcast %cst_52 : f32 to vector<8x1xf32>
    %121 = arith.mulf %120, %66 : vector<8x1xf32>
    %122 = arith.addf %121, %115 : vector<8x1xf32>
    %cst_53 = arith.constant 1.000000e+00 : f32
    %123 = vector.broadcast %cst_53 : f32 to vector<8x1xf32>
    %124 = arith.mulf %119, %123 : vector<8x1xf32>
    %125 = arith.subf %122, %124 : vector<8x1xf32>
    %c0_54 = arith.constant 0 : index
    %c1_55 = arith.constant 1 : index
    %126 = vector.load %arg8[%c0_54, %c1_55] : memref<8x8xf32, #tpu.memory_space<vmem>>, vector<8x1xf32>
    tpu.vector_store %arg8[%c0_54, %c1_55], %125 {strides = array<i32>} : memref<8x8xf32, #tpu.memory_space<vmem>>, vector<8x1xf32>,
    %c0_56 = arith.constant 0 : index
    %c2 = arith.constant 2 : index
    %c0_57 = arith.constant 0 : index
    %127 = vector.load %arg1[%c0_56, %c2, %c0_57] : memref<8x8x64xf32, #tpu.memory_space<vmem>>, vector<8x1x64xf32>
    %128 = vector.shape_cast %127 : vector<8x1x64xf32> to vector<8x64xf32>
    %cst_58 = arith.constant dense<0.000000e+00> : vector<8x128xf32>
    %129 = tpu.matmul %128, %0, %cst_58 {dimension_numbers = #tpu.dot_dimension_numbers<[1], [0], [0], [1], [0, 0, 1, 1], [], []>} : vector<8x64xf32>, vector<64x128xf32>, vector<8x128xf32> -> vector<8x128xf32>
    %130 = vector.broadcast %1 : vector<1x128xf32> to vector<8x128xf32>
    %131 = arith.addf %129, %130 : vector<8x128xf32>
    %cst_59 = arith.constant 0.000000e+00 : f32
    %132 = vector.broadcast %cst_59 : f32 to vector<8x128xf32>
    %133 = arith.maximumf %131, %132 : vector<8x128xf32>
    %cst_60 = arith.constant 1.000000e+00 : f32
    %134 = vector.broadcast %cst_60 : f32 to vector<8x128xf32>
    %135 = arith.cmpf ogt, %84, %134 : vector<8x128xf32>
    %136 = arith.extui %135 : vector<8x128xi1> to vector<8x128xi32>
    %137 = arith.sitofp %136 : vector<8x128xi32> to vector<8x128xf32>
    %cst_61 = arith.constant 0.949999988 : f32
    %138 = vector.broadcast %cst_61 : f32 to vector<8x128xf32>
    %139 = arith.mulf %138, %84 : vector<8x128xf32>
    %140 = arith.addf %139, %133 : vector<8x128xf32>
    %cst_62 = arith.constant 1.000000e+00 : f32
    %141 = vector.broadcast %cst_62 : f32 to vector<8x128xf32>
    %142 = arith.mulf %137, %141 : vector<8x128xf32>
    %143 = arith.subf %140, %142 : vector<8x128xf32>
    %cst_63 = arith.constant 1.000000e+00 : f32
    %144 = vector.broadcast %cst_63 : f32 to vector<8x128xf32>
    %145 = arith.cmpf ogt, %143, %144 : vector<8x128xf32>
    %146 = arith.extui %145 : vector<8x128xi1> to vector<8x128xi32>
    %147 = arith.sitofp %146 : vector<8x128xi32> to vector<8x128xf32>
    %cst_64 = arith.constant dense<0.000000e+00> : vector<8x64xf32>
    %148 = tpu.matmul %147, %2, %cst_64 {dimension_numbers = #tpu.dot_dimension_numbers<[1], [0], [0], [1], [0, 0, 1, 1], [], []>} : vector<8x128xf32>, vector<128x64xf32>, vector<8x64xf32> -> vector<8x64xf32>
    %149 = vector.broadcast %3 : vector<1x64xf32> to vector<8x64xf32>
    %150 = arith.addf %148, %149 : vector<8x64xf32>
    %cst_65 = arith.constant 0.000000e+00 : f32
    %151 = vector.broadcast %cst_65 : f32 to vector<8x64xf32>
    %152 = arith.maximumf %150, %151 : vector<8x64xf32>
    %cst_66 = arith.constant 1.000000e+00 : f32
    %153 = vector.broadcast %cst_66 : f32 to vector<8x64xf32>
    %154 = arith.cmpf ogt, %103, %153 : vector<8x64xf32>
    %155 = arith.extui %154 : vector<8x64xi1> to vector<8x64xi32>
    %156 = arith.sitofp %155 : vector<8x64xi32> to vector<8x64xf32>
    %cst_67 = arith.constant 0.949999988 : f32
    %157 = vector.broadcast %cst_67 : f32 to vector<8x64xf32>
    %158 = arith.mulf %157, %103 : vector<8x64xf32>
    %159 = arith.addf %158, %152 : vector<8x64xf32>
    %cst_68 = arith.constant 1.000000e+00 : f32
    %160 = vector.broadcast %cst_68 : f32 to vector<8x64xf32>
    %161 = arith.mulf %156, %160 : vector<8x64xf32>
    %162 = arith.subf %159, %161 : vector<8x64xf32>
    %cst_69 = arith.constant 1.000000e+00 : f32
    %163 = vector.broadcast %cst_69 : f32 to vector<8x64xf32>
    %164 = arith.cmpf ogt, %162, %163 : vector<8x64xf32>
    %165 = arith.extui %164 : vector<8x64xi1> to vector<8x64xi32>
    %166 = arith.sitofp %165 : vector<8x64xi32> to vector<8x64xf32>
    %167 = vector.broadcast %4 : vector<1x64xf32> to vector<8x64xf32>
    %168 = arith.mulf %166, %167 : vector<8x64xf32>
    %cst_70 = arith.constant dense<0.000000e+00> : vector<8xf32>
    %169 = vector.multi_reduction <add>, %168, %cst_70 [1] : vector<8x64xf32> to vector<8xf32>
    %170 = vector.shape_cast %169 : vector<8xf32> to vector<8x1xf32>
    %171 = vector.broadcast %5 : vector<1x1xf32> to vector<8x1xf32>
    %172 = arith.addf %170, %171 : vector<8x1xf32>
    %cst_71 = arith.constant 0.000000e+00 : f32
    %173 = vector.broadcast %cst_71 : f32 to vector<8x1xf32>
    %174 = arith.maximumf %172, %173 : vector<8x1xf32>
    %cst_72 = arith.constant 1.000000e+00 : f32
    %175 = vector.broadcast %cst_72 : f32 to vector<8x1xf32>
    %176 = arith.cmpf ogt, %125, %175 : vector<8x1xf32>
    %177 = arith.extui %176 : vector<8x1xi1> to vector<8x1xi32>
    %178 = arith.sitofp %177 : vector<8x1xi32> to vector<8x1xf32>
    %cst_73 = arith.constant 0.949999988 : f32
    %179 = vector.broadcast %cst_73 : f32 to vector<8x1xf32>
    %180 = arith.mulf %179, %125 : vector<8x1xf32>
    %181 = arith.addf %180, %174 : vector<8x1xf32>
    %cst_74 = arith.constant 1.000000e+00 : f32
    %182 = vector.broadcast %cst_74 : f32 to vector<8x1xf32>
    %183 = arith.mulf %178, %182 : vector<8x1xf32>
    %184 = arith.subf %181, %183 : vector<8x1xf32>
    %c0_75 = arith.constant 0 : index
    %c2_76 = arith.constant 2 : index
    %185 = vector.load %arg8[%c0_75, %c2_76] : memref<8x8xf32, #tpu.memory_space<vmem>>, vector<8x1xf32>
    tpu.vector_store %arg8[%c0_75, %c2_76], %184 {strides = array<i32>} : memref<8x8xf32, #tpu.memory_space<vmem>>, vector<8x1xf32>,
    %c0_77 = arith.constant 0 : index
    %c3 = arith.constant 3 : index
    %c0_78 = arith.constant 0 : index
    %186 = vector.load %arg1[%c0_77, %c3, %c0_78] : memref<8x8x64xf32, #tpu.memory_space<vmem>>, vector<8x1x64xf32>
    %187 = vector.shape_cast %186 : vector<8x1x64xf32> to vector<8x64xf32>
    %cst_79 = arith.constant dense<0.000000e+00> : vector<8x128xf32>
    %188 = tpu.matmul %187, %0, %cst_79 {dimension_numbers = #tpu.dot_dimension_numbers<[1], [0], [0], [1], [0, 0, 1, 1], [], []>} : vector<8x64xf32>, vector<64x128xf32>, vector<8x128xf32> -> vector<8x128xf32>
    %189 = vector.broadcast %1 : vector<1x128xf32> to vector<8x128xf32>
    %190 = arith.addf %188, %189 : vector<8x128xf32>
    %cst_80 = arith.constant 0.000000e+00 : f32
    %191 = vector.broadcast %cst_80 : f32 to vector<8x128xf32>
    %192 = arith.maximumf %190, %191 : vector<8x128xf32>
    %cst_81 = arith.constant 1.000000e+00 : f32
    %193 = vector.broadcast %cst_81 : f32 to vector<8x128xf32>
    %194 = arith.cmpf ogt, %143, %193 : vector<8x128xf32>
    %195 = arith.extui %194 : vector<8x128xi1> to vector<8x128xi32>
    %196 = arith.sitofp %195 : vector<8x128xi32> to vector<8x128xf32>
    %cst_82 = arith.constant 0.949999988 : f32
    %197 = vector.broadcast %cst_82 : f32 to vector<8x128xf32>
    %198 = arith.mulf %197, %143 : vector<8x128xf32>
    %199 = arith.addf %198, %192 : vector<8x128xf32>
    %cst_83 = arith.constant 1.000000e+00 : f32
    %200 = vector.broadcast %cst_83 : f32 to vector<8x128xf32>
    %201 = arith.mulf %196, %200 : vector<8x128xf32>
    %202 = arith.subf %199, %201 : vector<8x128xf32>
    %cst_84 = arith.constant 1.000000e+00 : f32
    %203 = vector.broadcast %cst_84 : f32 to vector<8x128xf32>
    %204 = arith.cmpf ogt, %202, %203 : vector<8x128xf32>
    %205 = arith.extui %204 : vector<8x128xi1> to vector<8x128xi32>
    %206 = arith.sitofp %205 : vector<8x128xi32> to vector<8x128xf32>
    %cst_85 = arith.constant dense<0.000000e+00> : vector<8x64xf32>
    %207 = tpu.matmul %206, %2, %cst_85 {dimension_numbers = #tpu.dot_dimension_numbers<[1], [0], [0], [1], [0, 0, 1, 1], [], []>} : vector<8x128xf32>, vector<128x64xf32>, vector<8x64xf32> -> vector<8x64xf32>
    %208 = vector.broadcast %3 : vector<1x64xf32> to vector<8x64xf32>
    %209 = arith.addf %207, %208 : vector<8x64xf32>
    %cst_86 = arith.constant 0.000000e+00 : f32
    %210 = vector.broadcast %cst_86 : f32 to vector<8x64xf32>
    %211 = arith.maximumf %209, %210 : vector<8x64xf32>
    %cst_87 = arith.constant 1.000000e+00 : f32
    %212 = vector.broadcast %cst_87 : f32 to vector<8x64xf32>
    %213 = arith.cmpf ogt, %162, %212 : vector<8x64xf32>
    %214 = arith.extui %213 : vector<8x64xi1> to vector<8x64xi32>
    %215 = arith.sitofp %214 : vector<8x64xi32> to vector<8x64xf32>
    %cst_88 = arith.constant 0.949999988 : f32
    %216 = vector.broadcast %cst_88 : f32 to vector<8x64xf32>
    %217 = arith.mulf %216, %162 : vector<8x64xf32>
    %218 = arith.addf %217, %211 : vector<8x64xf32>
    %cst_89 = arith.constant 1.000000e+00 : f32
    %219 = vector.broadcast %cst_89 : f32 to vector<8x64xf32>
    %220 = arith.mulf %215, %219 : vector<8x64xf32>
    %221 = arith.subf %218, %220 : vector<8x64xf32>
    %cst_90 = arith.constant 1.000000e+00 : f32
    %222 = vector.broadcast %cst_90 : f32 to vector<8x64xf32>
    %223 = arith.cmpf ogt, %221, %222 : vector<8x64xf32>
    %224 = arith.extui %223 : vector<8x64xi1> to vector<8x64xi32>
    %225 = arith.sitofp %224 : vector<8x64xi32> to vector<8x64xf32>
    %226 = vector.broadcast %4 : vector<1x64xf32> to vector<8x64xf32>
    %227 = arith.mulf %225, %226 : vector<8x64xf32>
    %cst_91 = arith.constant dense<0.000000e+00> : vector<8xf32>
    %228 = vector.multi_reduction <add>, %227, %cst_91 [1] : vector<8x64xf32> to vector<8xf32>
    %229 = vector.shape_cast %228 : vector<8xf32> to vector<8x1xf32>
    %230 = vector.broadcast %5 : vector<1x1xf32> to vector<8x1xf32>
    %231 = arith.addf %229, %230 : vector<8x1xf32>
    %cst_92 = arith.constant 0.000000e+00 : f32
    %232 = vector.broadcast %cst_92 : f32 to vector<8x1xf32>
    %233 = arith.maximumf %231, %232 : vector<8x1xf32>
    %cst_93 = arith.constant 1.000000e+00 : f32
    %234 = vector.broadcast %cst_93 : f32 to vector<8x1xf32>
    %235 = arith.cmpf ogt, %184, %234 : vector<8x1xf32>
    %236 = arith.extui %235 : vector<8x1xi1> to vector<8x1xi32>
    %237 = arith.sitofp %236 : vector<8x1xi32> to vector<8x1xf32>
    %cst_94 = arith.constant 0.949999988 : f32
    %238 = vector.broadcast %cst_94 : f32 to vector<8x1xf32>
    %239 = arith.mulf %238, %184 : vector<8x1xf32>
    %240 = arith.addf %239, %233 : vector<8x1xf32>
    %cst_95 = arith.constant 1.000000e+00 : f32
    %241 = vector.broadcast %cst_95 : f32 to vector<8x1xf32>
    %242 = arith.mulf %237, %241 : vector<8x1xf32>
    %243 = arith.subf %240, %242 : vector<8x1xf32>
    %c0_96 = arith.constant 0 : index
    %c3_97 = arith.constant 3 : index
    %244 = vector.load %arg8[%c0_96, %c3_97] : memref<8x8xf32, #tpu.memory_space<vmem>>, vector<8x1xf32>
    tpu.vector_store %arg8[%c0_96, %c3_97], %243 {strides = array<i32>} : memref<8x8xf32, #tpu.memory_space<vmem>>, vector<8x1xf32>,
    %c0_98 = arith.constant 0 : index
    %c4 = arith.constant 4 : index
    %c0_99 = arith.constant 0 : index
    %245 = vector.load %arg1[%c0_98, %c4, %c0_99] : memref<8x8x64xf32, #tpu.memory_space<vmem>>, vector<8x1x64xf32>
    %246 = vector.shape_cast %245 : vector<8x1x64xf32> to vector<8x64xf32>
    %cst_100 = arith.constant dense<0.000000e+00> : vector<8x128xf32>
    %247 = tpu.matmul %246, %0, %cst_100 {dimension_numbers = #tpu.dot_dimension_numbers<[1], [0], [0], [1], [0, 0, 1, 1], [], []>} : vector<8x64xf32>, vector<64x128xf32>, vector<8x128xf32> -> vector<8x128xf32>
    %248 = vector.broadcast %1 : vector<1x128xf32> to vector<8x128xf32>
    %249 = arith.addf %247, %248 : vector<8x128xf32>
    %cst_101 = arith.constant 0.000000e+00 : f32
    %250 = vector.broadcast %cst_101 : f32 to vector<8x128xf32>
    %251 = arith.maximumf %249, %250 : vector<8x128xf32>
    %cst_102 = arith.constant 1.000000e+00 : f32
    %252 = vector.broadcast %cst_102 : f32 to vector<8x128xf32>
    %253 = arith.cmpf ogt, %202, %252 : vector<8x128xf32>
    %254 = arith.extui %253 : vector<8x128xi1> to vector<8x128xi32>
    %255 = arith.sitofp %254 : vector<8x128xi32> to vector<8x128xf32>
    %cst_103 = arith.constant 0.949999988 : f32
    %256 = vector.broadcast %cst_103 : f32 to vector<8x128xf32>
    %257 = arith.mulf %256, %202 : vector<8x128xf32>
    %258 = arith.addf %257, %251 : vector<8x128xf32>
    %cst_104 = arith.constant 1.000000e+00 : f32
    %259 = vector.broadcast %cst_104 : f32 to vector<8x128xf32>
    %260 = arith.mulf %255, %259 : vector<8x128xf32>
    %261 = arith.subf %258, %260 : vector<8x128xf32>
    %cst_105 = arith.constant 1.000000e+00 : f32
    %262 = vector.broadcast %cst_105 : f32 to vector<8x128xf32>
    %263 = arith.cmpf ogt, %261, %262 : vector<8x128xf32>
    %264 = arith.extui %263 : vector<8x128xi1> to vector<8x128xi32>
    %265 = arith.sitofp %264 : vector<8x128xi32> to vector<8x128xf32>
    %cst_106 = arith.constant dense<0.000000e+00> : vector<8x64xf32>
    %266 = tpu.matmul %265, %2, %cst_106 {dimension_numbers = #tpu.dot_dimension_numbers<[1], [0], [0], [1], [0, 0, 1, 1], [], []>} : vector<8x128xf32>, vector<128x64xf32>, vector<8x64xf32> -> vector<8x64xf32>
    %267 = vector.broadcast %3 : vector<1x64xf32> to vector<8x64xf32>
    %268 = arith.addf %266, %267 : vector<8x64xf32>
    %cst_107 = arith.constant 0.000000e+00 : f32
    %269 = vector.broadcast %cst_107 : f32 to vector<8x64xf32>
    %270 = arith.maximumf %268, %269 : vector<8x64xf32>
    %cst_108 = arith.constant 1.000000e+00 : f32
    %271 = vector.broadcast %cst_108 : f32 to vector<8x64xf32>
    %272 = arith.cmpf ogt, %221, %271 : vector<8x64xf32>
    %273 = arith.extui %272 : vector<8x64xi1> to vector<8x64xi32>
    %274 = arith.sitofp %273 : vector<8x64xi32> to vector<8x64xf32>
    %cst_109 = arith.constant 0.949999988 : f32
    %275 = vector.broadcast %cst_109 : f32 to vector<8x64xf32>
    %276 = arith.mulf %275, %221 : vector<8x64xf32>
    %277 = arith.addf %276, %270 : vector<8x64xf32>
    %cst_110 = arith.constant 1.000000e+00 : f32
    %278 = vector.broadcast %cst_110 : f32 to vector<8x64xf32>
    %279 = arith.mulf %274, %278 : vector<8x64xf32>
    %280 = arith.subf %277, %279 : vector<8x64xf32>
    %cst_111 = arith.constant 1.000000e+00 : f32
    %281 = vector.broadcast %cst_111 : f32 to vector<8x64xf32>
    %282 = arith.cmpf ogt, %280, %281 : vector<8x64xf32>
    %283 = arith.extui %282 : vector<8x64xi1> to vector<8x64xi32>
    %284 = arith.sitofp %283 : vector<8x64xi32> to vector<8x64xf32>
    %285 = vector.broadcast %4 : vector<1x64xf32> to vector<8x64xf32>
    %286 = arith.mulf %284, %285 : vector<8x64xf32>
    %cst_112 = arith.constant dense<0.000000e+00> : vector<8xf32>
    %287 = vector.multi_reduction <add>, %286, %cst_112 [1] : vector<8x64xf32> to vector<8xf32>
    %288 = vector.shape_cast %287 : vector<8xf32> to vector<8x1xf32>
    %289 = vector.broadcast %5 : vector<1x1xf32> to vector<8x1xf32>
    %290 = arith.addf %288, %289 : vector<8x1xf32>
    %cst_113 = arith.constant 0.000000e+00 : f32
    %291 = vector.broadcast %cst_113 : f32 to vector<8x1xf32>
    %292 = arith.maximumf %290, %291 : vector<8x1xf32>
    %cst_114 = arith.constant 1.000000e+00 : f32
    %293 = vector.broadcast %cst_114 : f32 to vector<8x1xf32>
    %294 = arith.cmpf ogt, %243, %293 : vector<8x1xf32>
    %295 = arith.extui %294 : vector<8x1xi1> to vector<8x1xi32>
    %296 = arith.sitofp %295 : vector<8x1xi32> to vector<8x1xf32>
    %cst_115 = arith.constant 0.949999988 : f32
    %297 = vector.broadcast %cst_115 : f32 to vector<8x1xf32>
    %298 = arith.mulf %297, %243 : vector<8x1xf32>
    %299 = arith.addf %298, %292 : vector<8x1xf32>
    %cst_116 = arith.constant 1.000000e+00 : f32
    %300 = vector.broadcast %cst_116 : f32 to vector<8x1xf32>
    %301 = arith.mulf %296, %300 : vector<8x1xf32>
    %302 = arith.subf %299, %301 : vector<8x1xf32>
    %c0_117 = arith.constant 0 : index
    %c4_118 = arith.constant 4 : index
    %303 = vector.load %arg8[%c0_117, %c4_118] : memref<8x8xf32, #tpu.memory_space<vmem>>, vector<8x1xf32>
    tpu.vector_store %arg8[%c0_117, %c4_118], %302 {strides = array<i32>} : memref<8x8xf32, #tpu.memory_space<vmem>>, vector<8x1xf32>,
    %c0_119 = arith.constant 0 : index
    %c5 = arith.constant 5 : index
    %c0_120 = arith.constant 0 : index
    %304 = vector.load %arg1[%c0_119, %c5, %c0_120] : memref<8x8x64xf32, #tpu.memory_space<vmem>>, vector<8x1x64xf32>
    %305 = vector.shape_cast %304 : vector<8x1x64xf32> to vector<8x64xf32>
    %cst_121 = arith.constant dense<0.000000e+00> : vector<8x128xf32>
    %306 = tpu.matmul %305, %0, %cst_121 {dimension_numbers = #tpu.dot_dimension_numbers<[1], [0], [0], [1], [0, 0, 1, 1], [], []>} : vector<8x64xf32>, vector<64x128xf32>, vector<8x128xf32> -> vector<8x128xf32>
    %307 = vector.broadcast %1 : vector<1x128xf32> to vector<8x128xf32>
    %308 = arith.addf %306, %307 : vector<8x128xf32>
    %cst_122 = arith.constant 0.000000e+00 : f32
    %309 = vector.broadcast %cst_122 : f32 to vector<8x128xf32>
    %310 = arith.maximumf %308, %309 : vector<8x128xf32>
    %cst_123 = arith.constant 1.000000e+00 : f32
    %311 = vector.broadcast %cst_123 : f32 to vector<8x128xf32>
    %312 = arith.cmpf ogt, %261, %311 : vector<8x128xf32>
    %313 = arith.extui %312 : vector<8x128xi1> to vector<8x128xi32>
    %314 = arith.sitofp %313 : vector<8x128xi32> to vector<8x128xf32>
    %cst_124 = arith.constant 0.949999988 : f32
    %315 = vector.broadcast %cst_124 : f32 to vector<8x128xf32>
    %316 = arith.mulf %315, %261 : vector<8x128xf32>
    %317 = arith.addf %316, %310 : vector<8x128xf32>
    %cst_125 = arith.constant 1.000000e+00 : f32
    %318 = vector.broadcast %cst_125 : f32 to vector<8x128xf32>
    %319 = arith.mulf %314, %318 : vector<8x128xf32>
    %320 = arith.subf %317, %319 : vector<8x128xf32>
    %cst_126 = arith.constant 1.000000e+00 : f32
    %321 = vector.broadcast %cst_126 : f32 to vector<8x128xf32>
    %322 = arith.cmpf ogt, %320, %321 : vector<8x128xf32>
    %323 = arith.extui %322 : vector<8x128xi1> to vector<8x128xi32>
    %324 = arith.sitofp %323 : vector<8x128xi32> to vector<8x128xf32>
    %cst_127 = arith.constant dense<0.000000e+00> : vector<8x64xf32>
    %325 = tpu.matmul %324, %2, %cst_127 {dimension_numbers = #tpu.dot_dimension_numbers<[1], [0], [0], [1], [0, 0, 1, 1], [], []>} : vector<8x128xf32>, vector<128x64xf32>, vector<8x64xf32> -> vector<8x64xf32>
    %326 = vector.broadcast %3 : vector<1x64xf32> to vector<8x64xf32>
    %327 = arith.addf %325, %326 : vector<8x64xf32>
    %cst_128 = arith.constant 0.000000e+00 : f32
    %328 = vector.broadcast %cst_128 : f32 to vector<8x64xf32>
    %329 = arith.maximumf %327, %328 : vector<8x64xf32>
    %cst_129 = arith.constant 1.000000e+00 : f32
    %330 = vector.broadcast %cst_129 : f32 to vector<8x64xf32>
    %331 = arith.cmpf ogt, %280, %330 : vector<8x64xf32>
    %332 = arith.extui %331 : vector<8x64xi1> to vector<8x64xi32>
    %333 = arith.sitofp %332 : vector<8x64xi32> to vector<8x64xf32>
    %cst_130 = arith.constant 0.949999988 : f32
    %334 = vector.broadcast %cst_130 : f32 to vector<8x64xf32>
    %335 = arith.mulf %334, %280 : vector<8x64xf32>
    %336 = arith.addf %335, %329 : vector<8x64xf32>
    %cst_131 = arith.constant 1.000000e+00 : f32
    %337 = vector.broadcast %cst_131 : f32 to vector<8x64xf32>
    %338 = arith.mulf %333, %337 : vector<8x64xf32>
    %339 = arith.subf %336, %338 : vector<8x64xf32>
    %cst_132 = arith.constant 1.000000e+00 : f32
    %340 = vector.broadcast %cst_132 : f32 to vector<8x64xf32>
    %341 = arith.cmpf ogt, %339, %340 : vector<8x64xf32>
    %342 = arith.extui %341 : vector<8x64xi1> to vector<8x64xi32>
    %343 = arith.sitofp %342 : vector<8x64xi32> to vector<8x64xf32>
    %344 = vector.broadcast %4 : vector<1x64xf32> to vector<8x64xf32>
    %345 = arith.mulf %343, %344 : vector<8x64xf32>
    %cst_133 = arith.constant dense<0.000000e+00> : vector<8xf32>
    %346 = vector.multi_reduction <add>, %345, %cst_133 [1] : vector<8x64xf32> to vector<8xf32>
    %347 = vector.shape_cast %346 : vector<8xf32> to vector<8x1xf32>
    %348 = vector.broadcast %5 : vector<1x1xf32> to vector<8x1xf32>
    %349 = arith.addf %347, %348 : vector<8x1xf32>
    %cst_134 = arith.constant 0.000000e+00 : f32
    %350 = vector.broadcast %cst_134 : f32 to vector<8x1xf32>
    %351 = arith.maximumf %349, %350 : vector<8x1xf32>
    %cst_135 = arith.constant 1.000000e+00 : f32
    %352 = vector.broadcast %cst_135 : f32 to vector<8x1xf32>
    %353 = arith.cmpf ogt, %302, %352 : vector<8x1xf32>
    %354 = arith.extui %353 : vector<8x1xi1> to vector<8x1xi32>
    %355 = arith.sitofp %354 : vector<8x1xi32> to vector<8x1xf32>
    %cst_136 = arith.constant 0.949999988 : f32
    %356 = vector.broadcast %cst_136 : f32 to vector<8x1xf32>
    %357 = arith.mulf %356, %302 : vector<8x1xf32>
    %358 = arith.addf %357, %351 : vector<8x1xf32>
    %cst_137 = arith.constant 1.000000e+00 : f32
    %359 = vector.broadcast %cst_137 : f32 to vector<8x1xf32>
    %360 = arith.mulf %355, %359 : vector<8x1xf32>
    %361 = arith.subf %358, %360 : vector<8x1xf32>
    %c0_138 = arith.constant 0 : index
    %c5_139 = arith.constant 5 : index
    %362 = vector.load %arg8[%c0_138, %c5_139] : memref<8x8xf32, #tpu.memory_space<vmem>>, vector<8x1xf32>
    tpu.vector_store %arg8[%c0_138, %c5_139], %361 {strides = array<i32>} : memref<8x8xf32, #tpu.memory_space<vmem>>, vector<8x1xf32>,
    %c0_140 = arith.constant 0 : index
    %c6 = arith.constant 6 : index
    %c0_141 = arith.constant 0 : index
    %363 = vector.load %arg1[%c0_140, %c6, %c0_141] : memref<8x8x64xf32, #tpu.memory_space<vmem>>, vector<8x1x64xf32>
    %364 = vector.shape_cast %363 : vector<8x1x64xf32> to vector<8x64xf32>
    %cst_142 = arith.constant dense<0.000000e+00> : vector<8x128xf32>
    %365 = tpu.matmul %364, %0, %cst_142 {dimension_numbers = #tpu.dot_dimension_numbers<[1], [0], [0], [1], [0, 0, 1, 1], [], []>} : vector<8x64xf32>, vector<64x128xf32>, vector<8x128xf32> -> vector<8x128xf32>
    %366 = vector.broadcast %1 : vector<1x128xf32> to vector<8x128xf32>
    %367 = arith.addf %365, %366 : vector<8x128xf32>
    %cst_143 = arith.constant 0.000000e+00 : f32
    %368 = vector.broadcast %cst_143 : f32 to vector<8x128xf32>
    %369 = arith.maximumf %367, %368 : vector<8x128xf32>
    %cst_144 = arith.constant 1.000000e+00 : f32
    %370 = vector.broadcast %cst_144 : f32 to vector<8x128xf32>
    %371 = arith.cmpf ogt, %320, %370 : vector<8x128xf32>
    %372 = arith.extui %371 : vector<8x128xi1> to vector<8x128xi32>
    %373 = arith.sitofp %372 : vector<8x128xi32> to vector<8x128xf32>
    %cst_145 = arith.constant 0.949999988 : f32
    %374 = vector.broadcast %cst_145 : f32 to vector<8x128xf32>
    %375 = arith.mulf %374, %320 : vector<8x128xf32>
    %376 = arith.addf %375, %369 : vector<8x128xf32>
    %cst_146 = arith.constant 1.000000e+00 : f32
    %377 = vector.broadcast %cst_146 : f32 to vector<8x128xf32>
    %378 = arith.mulf %373, %377 : vector<8x128xf32>
    %379 = arith.subf %376, %378 : vector<8x128xf32>
    %cst_147 = arith.constant 1.000000e+00 : f32
    %380 = vector.broadcast %cst_147 : f32 to vector<8x128xf32>
    %381 = arith.cmpf ogt, %379, %380 : vector<8x128xf32>
    %382 = arith.extui %381 : vector<8x128xi1> to vector<8x128xi32>
    %383 = arith.sitofp %382 : vector<8x128xi32> to vector<8x128xf32>
    %cst_148 = arith.constant dense<0.000000e+00> : vector<8x64xf32>
    %384 = tpu.matmul %383, %2, %cst_148 {dimension_numbers = #tpu.dot_dimension_numbers<[1], [0], [0], [1], [0, 0, 1, 1], [], []>} : vector<8x128xf32>, vector<128x64xf32>, vector<8x64xf32> -> vector<8x64xf32>
    %385 = vector.broadcast %3 : vector<1x64xf32> to vector<8x64xf32>
    %386 = arith.addf %384, %385 : vector<8x64xf32>
    %cst_149 = arith.constant 0.000000e+00 : f32
    %387 = vector.broadcast %cst_149 : f32 to vector<8x64xf32>
    %388 = arith.maximumf %386, %387 : vector<8x64xf32>
    %cst_150 = arith.constant 1.000000e+00 : f32
    %389 = vector.broadcast %cst_150 : f32 to vector<8x64xf32>
    %390 = arith.cmpf ogt, %339, %389 : vector<8x64xf32>
    %391 = arith.extui %390 : vector<8x64xi1> to vector<8x64xi32>
    %392 = arith.sitofp %391 : vector<8x64xi32> to vector<8x64xf32>
    %cst_151 = arith.constant 0.949999988 : f32
    %393 = vector.broadcast %cst_151 : f32 to vector<8x64xf32>
    %394 = arith.mulf %393, %339 : vector<8x64xf32>
    %395 = arith.addf %394, %388 : vector<8x64xf32>
    %cst_152 = arith.constant 1.000000e+00 : f32
    %396 = vector.broadcast %cst_152 : f32 to vector<8x64xf32>
    %397 = arith.mulf %392, %396 : vector<8x64xf32>
    %398 = arith.subf %395, %397 : vector<8x64xf32>
    %cst_153 = arith.constant 1.000000e+00 : f32
    %399 = vector.broadcast %cst_153 : f32 to vector<8x64xf32>
    %400 = arith.cmpf ogt, %398, %399 : vector<8x64xf32>
    %401 = arith.extui %400 : vector<8x64xi1> to vector<8x64xi32>
    %402 = arith.sitofp %401 : vector<8x64xi32> to vector<8x64xf32>
    %403 = vector.broadcast %4 : vector<1x64xf32> to vector<8x64xf32>
    %404 = arith.mulf %402, %403 : vector<8x64xf32>
    %cst_154 = arith.constant dense<0.000000e+00> : vector<8xf32>
    %405 = vector.multi_reduction <add>, %404, %cst_154 [1] : vector<8x64xf32> to vector<8xf32>
    %406 = vector.shape_cast %405 : vector<8xf32> to vector<8x1xf32>
    %407 = vector.broadcast %5 : vector<1x1xf32> to vector<8x1xf32>
    %408 = arith.addf %406, %407 : vector<8x1xf32>
    %cst_155 = arith.constant 0.000000e+00 : f32
    %409 = vector.broadcast %cst_155 : f32 to vector<8x1xf32>
    %410 = arith.maximumf %408, %409 : vector<8x1xf32>
    %cst_156 = arith.constant 1.000000e+00 : f32
    %411 = vector.broadcast %cst_156 : f32 to vector<8x1xf32>
    %412 = arith.cmpf ogt, %361, %411 : vector<8x1xf32>
    %413 = arith.extui %412 : vector<8x1xi1> to vector<8x1xi32>
    %414 = arith.sitofp %413 : vector<8x1xi32> to vector<8x1xf32>
    %cst_157 = arith.constant 0.949999988 : f32
    %415 = vector.broadcast %cst_157 : f32 to vector<8x1xf32>
    %416 = arith.mulf %415, %361 : vector<8x1xf32>
    %417 = arith.addf %416, %410 : vector<8x1xf32>
    %cst_158 = arith.constant 1.000000e+00 : f32
    %418 = vector.broadcast %cst_158 : f32 to vector<8x1xf32>
    %419 = arith.mulf %414, %418 : vector<8x1xf32>
    %420 = arith.subf %417, %419 : vector<8x1xf32>
    %c0_159 = arith.constant 0 : index
    %c6_160 = arith.constant 6 : index
    %421 = vector.load %arg8[%c0_159, %c6_160] : memref<8x8xf32, #tpu.memory_space<vmem>>, vector<8x1xf32>
    tpu.vector_store %arg8[%c0_159, %c6_160], %420 {strides = array<i32>} : memref<8x8xf32, #tpu.memory_space<vmem>>, vector<8x1xf32>,
    %c0_161 = arith.constant 0 : index
    %c7 = arith.constant 7 : index
    %c0_162 = arith.constant 0 : index
    %422 = vector.load %arg1[%c0_161, %c7, %c0_162] : memref<8x8x64xf32, #tpu.memory_space<vmem>>, vector<8x1x64xf32>
    %423 = vector.shape_cast %422 : vector<8x1x64xf32> to vector<8x64xf32>
    %cst_163 = arith.constant dense<0.000000e+00> : vector<8x128xf32>
    %424 = tpu.matmul %423, %0, %cst_163 {dimension_numbers = #tpu.dot_dimension_numbers<[1], [0], [0], [1], [0, 0, 1, 1], [], []>} : vector<8x64xf32>, vector<64x128xf32>, vector<8x128xf32> -> vector<8x128xf32>
    %425 = vector.broadcast %1 : vector<1x128xf32> to vector<8x128xf32>
    %426 = arith.addf %424, %425 : vector<8x128xf32>
    %cst_164 = arith.constant 0.000000e+00 : f32
    %427 = vector.broadcast %cst_164 : f32 to vector<8x128xf32>
    %428 = arith.maximumf %426, %427 : vector<8x128xf32>
    %cst_165 = arith.constant 1.000000e+00 : f32
    %429 = vector.broadcast %cst_165 : f32 to vector<8x128xf32>
    %430 = arith.cmpf ogt, %379, %429 : vector<8x128xf32>
    %431 = arith.extui %430 : vector<8x128xi1> to vector<8x128xi32>
    %432 = arith.sitofp %431 : vector<8x128xi32> to vector<8x128xf32>
    %cst_166 = arith.constant 0.949999988 : f32
    %433 = vector.broadcast %cst_166 : f32 to vector<8x128xf32>
    %434 = arith.mulf %433, %379 : vector<8x128xf32>
    %435 = arith.addf %434, %428 : vector<8x128xf32>
    %cst_167 = arith.constant 1.000000e+00 : f32
    %436 = vector.broadcast %cst_167 : f32 to vector<8x128xf32>
    %437 = arith.mulf %432, %436 : vector<8x128xf32>
    %438 = arith.subf %435, %437 : vector<8x128xf32>
    %cst_168 = arith.constant 1.000000e+00 : f32
    %439 = vector.broadcast %cst_168 : f32 to vector<8x128xf32>
    %440 = arith.cmpf ogt, %438, %439 : vector<8x128xf32>
    %441 = arith.extui %440 : vector<8x128xi1> to vector<8x128xi32>
    %442 = arith.sitofp %441 : vector<8x128xi32> to vector<8x128xf32>
    %cst_169 = arith.constant dense<0.000000e+00> : vector<8x64xf32>
    %443 = tpu.matmul %442, %2, %cst_169 {dimension_numbers = #tpu.dot_dimension_numbers<[1], [0], [0], [1], [0, 0, 1, 1], [], []>} : vector<8x128xf32>, vector<128x64xf32>, vector<8x64xf32> -> vector<8x64xf32>
    %444 = vector.broadcast %3 : vector<1x64xf32> to vector<8x64xf32>
    %445 = arith.addf %443, %444 : vector<8x64xf32>
    %cst_170 = arith.constant 0.000000e+00 : f32
    %446 = vector.broadcast %cst_170 : f32 to vector<8x64xf32>
    %447 = arith.maximumf %445, %446 : vector<8x64xf32>
    %cst_171 = arith.constant 1.000000e+00 : f32
    %448 = vector.broadcast %cst_171 : f32 to vector<8x64xf32>
    %449 = arith.cmpf ogt, %398, %448 : vector<8x64xf32>
    %450 = arith.extui %449 : vector<8x64xi1> to vector<8x64xi32>
    %451 = arith.sitofp %450 : vector<8x64xi32> to vector<8x64xf32>
    %cst_172 = arith.constant 0.949999988 : f32
    %452 = vector.broadcast %cst_172 : f32 to vector<8x64xf32>
    %453 = arith.mulf %452, %398 : vector<8x64xf32>
    %454 = arith.addf %453, %447 : vector<8x64xf32>
    %cst_173 = arith.constant 1.000000e+00 : f32
    %455 = vector.broadcast %cst_173 : f32 to vector<8x64xf32>
    %456 = arith.mulf %451, %455 : vector<8x64xf32>
    %457 = arith.subf %454, %456 : vector<8x64xf32>
    %cst_174 = arith.constant 1.000000e+00 : f32
    %458 = vector.broadcast %cst_174 : f32 to vector<8x64xf32>
    %459 = arith.cmpf ogt, %457, %458 : vector<8x64xf32>
    %460 = arith.extui %459 : vector<8x64xi1> to vector<8x64xi32>
    %461 = arith.sitofp %460 : vector<8x64xi32> to vector<8x64xf32>
    %462 = vector.broadcast %4 : vector<1x64xf32> to vector<8x64xf32>
    %463 = arith.mulf %461, %462 : vector<8x64xf32>
    %cst_175 = arith.constant dense<0.000000e+00> : vector<8xf32>
    %464 = vector.multi_reduction <add>, %463, %cst_175 [1] : vector<8x64xf32> to vector<8xf32>
    %465 = vector.shape_cast %464 : vector<8xf32> to vector<8x1xf32>
    %466 = vector.broadcast %5 : vector<1x1xf32> to vector<8x1xf32>
    %467 = arith.addf %465, %466 : vector<8x1xf32>
    %cst_176 = arith.constant 0.000000e+00 : f32
    %468 = vector.broadcast %cst_176 : f32 to vector<8x1xf32>
    %469 = arith.maximumf %467, %468 : vector<8x1xf32>
    %cst_177 = arith.constant 1.000000e+00 : f32
    %470 = vector.broadcast %cst_177 : f32 to vector<8x1xf32>
    %471 = arith.cmpf ogt, %420, %470 : vector<8x1xf32>
    %472 = arith.extui %471 : vector<8x1xi1> to vector<8x1xi32>
    %473 = arith.sitofp %472 : vector<8x1xi32> to vector<8x1xf32>
    %cst_178 = arith.constant 0.949999988 : f32
    %474 = vector.broadcast %cst_178 : f32 to vector<8x1xf32>
    %475 = arith.mulf %474, %420 : vector<8x1xf32>
    %476 = arith.addf %475, %469 : vector<8x1xf32>
    %cst_179 = arith.constant 1.000000e+00 : f32
    %477 = vector.broadcast %cst_179 : f32 to vector<8x1xf32>
    %478 = arith.mulf %473, %477 : vector<8x1xf32>
    %479 = arith.subf %476, %478 : vector<8x1xf32>
    %c0_180 = arith.constant 0 : index
    %c7_181 = arith.constant 7 : index
    %480 = vector.load %arg8[%c0_180, %c7_181] : memref<8x8xf32, #tpu.memory_space<vmem>>, vector<8x1xf32>
    tpu.vector_store %arg8[%c0_180, %c7_181], %479 {strides = array<i32>} : memref<8x8xf32, #tpu.memory_space<vmem>>, vector<8x1xf32>,
    return
  }
  func.func @transform_0(%arg0: i32) -> (i32, i32, i32) {
    %c0_i32 = arith.constant 0 : i32
    %c0_i32_0 = arith.constant 0 : i32
    %c0_i32_1 = arith.constant 0 : i32
    return %arg0, %c0_i32, %c0_i32_0 : i32, i32, i32
  }
  func.func @transform_1(%arg0: i32) -> (i32, i32) {
    %c0_i32 = arith.constant 0 : i32
    %c0_i32_0 = arith.constant 0 : i32
    %c0_i32_1 = arith.constant 0 : i32
    return %c0_i32, %c0_i32_0 : i32, i32
  }
  func.func @transform_2(%arg0: i32) -> (i32, i32) {
    %c0_i32 = arith.constant 0 : i32
    %c0_i32_0 = arith.constant 0 : i32
    %c0_i32_1 = arith.constant 0 : i32
    return %c0_i32, %c0_i32_0 : i32, i32
  }
  func.func @transform_3(%arg0: i32) -> (i32, i32) {
    %c0_i32 = arith.constant 0 : i32
    %c0_i32_0 = arith.constant 0 : i32
    %c0_i32_1 = arith.constant 0 : i32
    return %c0_i32, %c0_i32_0 : i32, i32
  }
  func.func @transform_4(%arg0: i32) -> (i32, i32) {
    %c0_i32 = arith.constant 0 : i32
    %c0_i32_0 = arith.constant 0 : i32
    %c0_i32_1 = arith.constant 0 : i32
    return %c0_i32, %c0_i32_0 : i32, i32
  }
  func.func @transform_5(%arg0: i32) -> (i32, i32) {
    %c0_i32 = arith.constant 0 : i32
    %c0_i32_0 = arith.constant 0 : i32
    %c0_i32_1 = arith.constant 0 : i32
    return %c0_i32, %c0_i32_0 : i32, i32
  }
  func.func @transform_6(%arg0: i32) -> (i32, i32) {
    %c0_i32 = arith.constant 0 : i32
    %c0_i32_0 = arith.constant 0 : i32
    %c0_i32_1 = arith.constant 0 : i32
    return %c0_i32, %c0_i32_0 : i32, i32
  }
  func.func @transform_7(%arg0: i32) -> (i32, i32) {
    %c0_i32 = arith.constant 0 : i32
    %c0_i32_0 = arith.constant 0 : i32
    return %arg0, %c0_i32 : i32, i32
  }
}

</mosaic_0001>

<llo_original>
// kernel: tpu_custom_call.1
$region0: #{tpu_custom_call.1}
  #allocation0 [shape = 'u32[]', space=smem, size = 0x4, offset = 0x4, fixed_abs, tag = 'smem constant byte address 0x4 - core index']
  #allocation1 [shape = 'u32[72,128]{1,0:T(1,128)}', space=vmem, size = 0x9000, scoped, tag = 'internal scratch']
  #allocation2 [shape = 'f32[1,1]{1,0:T(1,128)S(1)}', space=vmem, size = 0x200, scoped, tag = 'scoped memory for tpu_custom_call.1']
  %s0 = inlined_call_operand.vmem [shape: f32[8,8,64], index: 0, kind: input, shape index: {}]
  %s1 = inlined_call_operand.vmem [shape: f32[64,128], index: 1, kind: input, shape index: {}]
  %s2 = inlined_call_operand.vmem [shape: f32[1,128], index: 2, kind: input, shape index: {}]
  %s3 = inlined_call_operand.vmem [shape: f32[128,64], index: 3, kind: input, shape index: {}]
  %s4 = inlined_call_operand.vmem [shape: f32[1,64], index: 4, kind: input, shape index: {}]
  %s5 = inlined_call_operand.vmem [shape: f32[1,64], index: 5, kind: input, shape index: {}]
  %s6 = inlined_call_operand.<no memory space> [shape: f32[1,1], index: 6, kind: input, shape index: {}]
  %s7 = inlined_call_operand.hbm [shape: f32[8,8], index: 7, kind: output, shape index: {}]
  %s8 = sld [smem:[#allocation0]]
  $region38: #{tpu_custom_call.1} parent=0
    _
  %s10 = ssub.s32 1, %s8
  %s11 = scalar_select 0, %s10, %s8
  %v12 = vstv %s6
  %13 = vst [vmem:[#allocation2] sm:$0x1] %v12
  $region1: #{tpu_custom_call.1} parent=0
    #allocation3 [shape = 'u8[4096]{0}', space=vmem, size = 0x1000, scoped, tag = 'output window, operand 0, single buffered']
    #allocation4 [shape = 's32[1]{0}', space=sflag, size = 0x4, scoped, tag = 'scoped memory for tpu_custom_call.1']
    %14 = vsyncpa [#allocation4], 0
    // Predicated region
    $region2: #{tpu_custom_call.1} parent=1 // pred_check
      _
    $region3: #{tpu_custom_call.1} parent=1 // pred_check_branch
      %16 = sbr.rel (0) target = $region5
    $region4: #{tpu_custom_call.1} parent=1 // pred_region
      _
    $region5: #{tpu_custom_call.1} parent=1 // pred_fallthru
      _
    // Predicated region
    $region6: #{tpu_custom_call.1} parent=1 // pred_check
      _
    $region7: #{tpu_custom_call.1} parent=1 // pred_check_branch
      %18 = sbr.rel (0) target = $region9
    $region8: #{tpu_custom_call.1} parent=1 // pred_region
      _
    $region9: #{tpu_custom_call.1} parent=1 // pred_fallthru
      _
    // Predicated region
    $region10: #{tpu_custom_call.1} parent=1 // pred_check
      _
    $region11: #{tpu_custom_call.1} parent=1 // pred_check_branch
      %20 = sbr.rel (0) target = $region13
    $region12: #{tpu_custom_call.1} parent=1 // pred_region
      _
    $region13: #{tpu_custom_call.1} parent=1 // pred_fallthru
      _
    // Predicated region
    $region14: #{tpu_custom_call.1} parent=1 // pred_check
      _
    $region15: #{tpu_custom_call.1} parent=1 // pred_check_branch
      %22 = sbr.rel (0) target = $region17
    $region16: #{tpu_custom_call.1} parent=1 // pred_region
      _
    $region17: #{tpu_custom_call.1} parent=1 // pred_fallthru
      _
    // Predicated region
    $region18: #{tpu_custom_call.1} parent=1 // pred_check
      _
    $region19: #{tpu_custom_call.1} parent=1 // pred_check_branch
      %24 = sbr.rel (0) target = $region21
    $region20: #{tpu_custom_call.1} parent=1 // pred_region
      _
    $region21: #{tpu_custom_call.1} parent=1 // pred_fallthru
      _
    // Predicated region
    $region22: #{tpu_custom_call.1} parent=1 // pred_check
      _
    $region23: #{tpu_custom_call.1} parent=1 // pred_check_branch
      %26 = sbr.rel (0) target = $region25
    $region24: #{tpu_custom_call.1} parent=1 // pred_region
      _
    $region25: #{tpu_custom_call.1} parent=1 // pred_fallthru
      _
    // Predicated region
    $region26: #{tpu_custom_call.1} parent=1 // pred_check
      _
    $region27: #{tpu_custom_call.1} parent=1 // pred_check_branch
      %28 = sbr.rel (0) target = $region29
    $region28: #{tpu_custom_call.1} parent=1 // pred_region
      _
    $region29: #{tpu_custom_call.1} parent=1 // pred_fallthru
      _
    %v29 = vld [vmem:[%s1] sm:$0xff]
    %v30 = vld [vmem:[%s1 + $0x8] sm:$0xff]
    %v31 = vld [vmem:[%s1 + $0x10] sm:$0xff]
    %v32 = vld [vmem:[%s1 + $0x18] sm:$0xff]
    %v33 = vld [vmem:[%s1 + $0x20] sm:$0xff]
    %v34 = vld [vmem:[%s1 + $0x28] sm:$0xff]
    %v35 = vld [vmem:[%s1 + $0x30] sm:$0xff]
    %v36 = vld [vmem:[%s1 + $0x38] sm:$0xff]
    %v37 = vld [vmem:[%s2] sm:$0x1]
    %v38 = vld [vmem:[%s3] sm:$0xff]
    %v39 = vld [vmem:[%s3 + $0x8] sm:$0xff]
    %v40 = vld [vmem:[%s3 + $0x10] sm:$0xff]
    %v41 = vld [vmem:[%s3 + $0x18] sm:$0xff]
    %v42 = vld [vmem:[%s3 + $0x20] sm:$0xff]
    %v43 = vld [vmem:[%s3 + $0x28] sm:$0xff]
    %v44 = vld [vmem:[%s3 + $0x30] sm:$0xff]
    %v45 = vld [vmem:[%s3 + $0x38] sm:$0xff]
    %v46 = vld [vmem:[%s3 + $0x40] sm:$0xff]
    %v47 = vld [vmem:[%s3 + $0x48] sm:$0xff]
    %v48 = vld [vmem:[%s3 + $0x50] sm:$0xff]
    %v49 = vld [vmem:[%s3 + $0x58] sm:$0xff]
    %v50 = vld [vmem:[%s3 + $0x60] sm:$0xff]
    %v51 = vld [vmem:[%s3 + $0x68] sm:$0xff]
    %v52 = vld [vmem:[%s3 + $0x70] sm:$0xff]
    %v53 = vld [vmem:[%s3 + $0x78] sm:$0xff]
    %v54 = vld [vmem:[%s4] sm:$0x1]
    %v55 = vld [vmem:[%s5] sm:$0x1]
    %v56 = vld [vmem:[#allocation2] sm:$0x1]
    %v57 = vld [vmem:[%s0] sm:$0x1]
    %v58 = vld [vmem:[%s0 + $0x8] sm:$0x1]
    %v59 = vld [vmem:[%s0 + $0x10] sm:$0x1]
    %v60 = vld [vmem:[%s0 + $0x18] sm:$0x1]
    %v61 = vld [vmem:[%s0 + $0x20] sm:$0x1]
    %v62 = vld [vmem:[%s0 + $0x28] sm:$0x1]
    %v63 = vld [vmem:[%s0 + $0x30] sm:$0x1]
    %v64 = vld [vmem:[%s0 + $0x38] sm:$0x1]
    %v66 = vperm.slane %v37, 0
    %v76 = vrot.slane %v58, 7
    %vm77 = vcmask 1041409
    %v78 = vsel %vm77, %v76, %v57
    %v79 = vrot.slane %v59, 6
    %vm80 = vcmask 1042434
    %v81 = vsel %vm80, %v79, %v78
    %v82 = vrot.slane %v60, 5
    %vm83 = vcmask 1043459
    %v84 = vsel %vm83, %v82, %v81
    %v85 = vrot.slane %v61, 4
    %vm86 = vcmask 1044484
    %v87 = vsel %vm86, %v85, %v84
    %v88 = vrot.slane %v62, 3
    %vm89 = vcmask 1045509
    %v90 = vsel %vm89, %v88, %v87
    %v91 = vrot.slane %v63, 2
    %vm92 = vcmask 1046534
    %v93 = vsel %vm92, %v91, %v90
    %v94 = vrot.slane %v64, 1
    %vm95 = vcmask 1047559
    %v96 = vsel %vm95, %v94, %v93
    %vm97 = vcmask 523264
    %v98 = vsel %vm97, %v96, 0
    %100 = vmatpush.msra.mxu0 0.0
    %101 = vmatpush.msra.mxu0 0.0
    %102 = vmatpush.msra.mxu0 0.0
    %103 = vmatpush.msra.mxu0 0.0
    %104 = vmatpush.msra.mxu0 0.0
    %105 = vmatpush.msra.mxu0 0.0
    %106 = vmatpush.msra.mxu0 0.0
    %107 = vmatpush.msra.mxu0 0.0
    %108 = vmatpush.msra.mxu0 %v36
    %109 = vmatpush.msra.mxu0 %v35
    %110 = vmatpush.msra.mxu0 %v34
    %111 = vmatpush.msra.mxu0 %v33
    %112 = vmatpush.msra.mxu0 %v32
    %113 = vmatpush.msra.mxu0 %v31
    %114 = vmatpush.msra.mxu0 %v30
    %115 = vmatpush.msra.mxu0 %v29
    %116 = vmatmul.f32.gmra.mxu0 %v98
    %v117 = vpop.f32.mrf.mxu0
    %v118 = vadd.f32 %v66, %v117
    %119 = vdwg.mxu0
    %v120 = vmax.f32 %v118, 0.0
    %vm121 = vcmp.gt.f32.partialorder 0.0, 1.0
    %v122 = vsel %vm121, 1, 0
    %v123 = vcvt.s32.f32 %v122
    %v124 = vadd.f32 %v120, 0.0
    %v125 = vsub.f32 %v124, %v123
    %vm126 = vcmp.gt.f32.partialorder %v125, 1.0
    %v127 = vsel %vm126, 1, 0
    %v128 = vcvt.s32.f32 %v127
    %v130 = vperm.slane %v54, 0
    %132 = vmatpush.msra.mxu0 %v53
    %133 = vmatpush.msra.mxu0 %v52
    %134 = vmatpush.msra.mxu0 %v51
    %135 = vmatpush.msra.mxu0 %v50
    %136 = vmatpush.msra.mxu0 %v49
    %137 = vmatpush.msra.mxu0 %v48
    %138 = vmatpush.msra.mxu0 %v47
    %139 = vmatpush.msra.mxu0 %v46
    %140 = vmatpush.msra.mxu0 %v45
    %141 = vmatpush.msra.mxu0 %v44
    %142 = vmatpush.msra.mxu0 %v43
    %143 = vmatpush.msra.mxu0 %v42
    %144 = vmatpush.msra.mxu0 %v41
    %145 = vmatpush.msra.mxu0 %v40
    %146 = vmatpush.msra.mxu0 %v39
    %147 = vmatpush.msra.mxu0 %v38
    %148 = vmatmul.f32.gmra.mxu0 %v128
    %v149 = vpop.f32.mrf.mxu0
    %v150 = vadd.f32 %v130, %v149
    %151 = vdwg.mxu0
    %v152 = vmax.f32 %v150, 0.0
    %v153 = vadd.f32 %v152, 0.0
    %v154 = vsub.f32 %v153, %v123
    %vm155 = vcmp.gt.f32.partialorder %v154, 1.0
    %v156 = vsel %vm155, 1, 0
    %v157 = vcvt.s32.f32 %v156
    %v159 = vperm.slane %v55, 0
    %v161 = vmul.f32 %v157, %v159
    %v162 = vsel %vm97, %v161, 0.0
    %163 = vadd.xlane.f32.xlu0 %v162
    %v164 = vpop.xlane.xlu0 %163
    %v166 = vperm.slane %v56, 0
    %v168 = vadd.f32 %v164, %v166
    %v169 = vmax.f32 %v168, 0.0
    %v170 = vadd.f32 %v169, 0.0
    %v171 = vsub.f32 %v170, %v123
    %vm172 = vcmask 7168
    %173 = vst.msk [vmem:[#allocation3] sm:$0xff] %vm172, %v171
    %v174 = vld [vmem:[%s0 + $0x1] sm:$0x1]
    %v175 = vld [vmem:[%s0 + $0x9] sm:$0x1]
    %v176 = vld [vmem:[%s0 + $0x11] sm:$0x1]
    %v177 = vld [vmem:[%s0 + $0x19] sm:$0x1]
    %v178 = vld [vmem:[%s0 + $0x21] sm:$0x1]
    %v179 = vld [vmem:[%s0 + $0x29] sm:$0x1]
    %v180 = vld [vmem:[%s0 + $0x31] sm:$0x1]
    %v181 = vld [vmem:[%s0 + $0x39] sm:$0x1]
    %v190 = vrot.slane %v175, 7
    %v191 = vsel %vm77, %v190, %v174
    %v192 = vrot.slane %v176, 6
    %v193 = vsel %vm80, %v192, %v191
    %v194 = vrot.slane %v177, 5
    %v195 = vsel %vm83, %v194, %v193
    %v196 = vrot.slane %v178, 4
    %v197 = vsel %vm86, %v196, %v195
    %v198 = vrot.slane %v179, 3
    %v199 = vsel %vm89, %v198, %v197
    %v200 = vrot.slane %v180, 2
    %v201 = vsel %vm92, %v200, %v199
    %v202 = vrot.slane %v181, 1
    %v203 = vsel %vm95, %v202, %v201
    %v204 = vsel %vm97, %v203, 0
    %206 = vmatpush.msra.mxu0 0.0
    %207 = vmatpush.msra.mxu0 0.0
    %208 = vmatpush.msra.mxu0 0.0
    %209 = vmatpush.msra.mxu0 0.0
    %210 = vmatpush.msra.mxu0 0.0
    %211 = vmatpush.msra.mxu0 0.0
    %212 = vmatpush.msra.mxu0 0.0
    %213 = vmatpush.msra.mxu0 0.0
    %214 = vmatpush.msra.mxu0 %v36
    %215 = vmatpush.msra.mxu0 %v35
    %216 = vmatpush.msra.mxu0 %v34
    %217 = vmatpush.msra.mxu0 %v33
    %218 = vmatpush.msra.mxu0 %v32
    %219 = vmatpush.msra.mxu0 %v31
    %220 = vmatpush.msra.mxu0 %v30
    %221 = vmatpush.msra.mxu0 %v29
    %222 = vmatmul.f32.gmra.mxu0 %v204
    %v223 = vpop.f32.mrf.mxu0
    %v224 = vadd.f32 %v66, %v223
    %225 = vdwg.mxu0
    %v226 = vmax.f32 %v224, 0.0
    %v227 = vmul.f32 %v125, 0.95
    %v228 = vadd.f32 %v227, %v226
    %v229 = vsub.f32 %v228, %v128
    %vm230 = vcmp.gt.f32.partialorder %v229, 1.0
    %v231 = vsel %vm230, 1, 0
    %v232 = vcvt.s32.f32 %v231
    %233 = vmatpush.msra.mxu0 %v53
    %234 = vmatpush.msra.mxu0 %v52
    %235 = vmatpush.msra.mxu0 %v51
    %236 = vmatpush.msra.mxu0 %v50
    %237 = vmatpush.msra.mxu0 %v49
    %238 = vmatpush.msra.mxu0 %v48
    %239 = vmatpush.msra.mxu0 %v47
    %240 = vmatpush.msra.mxu0 %v46
    %241 = vmatpush.msra.mxu0 %v45
    %242 = vmatpush.msra.mxu0 %v44
    %243 = vmatpush.msra.mxu0 %v43
    %244 = vmatpush.msra.mxu0 %v42
    %245 = vmatpush.msra.mxu0 %v41
    %246 = vmatpush.msra.mxu0 %v40
    %247 = vmatpush.msra.mxu0 %v39
    %248 = vmatpush.msra.mxu0 %v38
    %249 = vmatmul.f32.gmra.mxu0 %v232
    %v250 = vpop.f32.mrf.mxu0
    %v251 = vadd.f32 %v130, %v250
    %252 = vdwg.mxu0
    %v253 = vmax.f32 %v251, 0.0
    %v254 = vmul.f32 %v154, 0.95
    %v255 = vadd.f32 %v254, %v253
    %v256 = vsub.f32 %v255, %v157
    %vm257 = vcmp.gt.f32.partialorder %v256, 1.0
    %v258 = vsel %vm257, 1, 0
    %v259 = vcvt.s32.f32 %v258
    %v260 = vmul.f32 %v259, %v159
    %v261 = vsel %vm97, %v260, 0.0
    %262 = vadd.xlane.f32.xlu0 %v261
    %v263 = vpop.xlane.xlu0 %262
    %v264 = vadd.f32 %v263, %v166
    %v265 = vmax.f32 %v264, 0.0
    %vm266 = vcmp.gt.f32.partialorder %v171, 1.0
    %v267 = vsel %vm266, 1, 0
    %v268 = vcvt.s32.f32 %v267
    %v269 = vmul.f32 %v171, 0.95
    %v270 = vadd.f32 %v269, %v265
    %v271 = vsub.f32 %v270, %v268
    %273 = vrot.lane.b32.xlu0 %v271, 1
    %v274 = vpop.permute.xlu0 %273
    %vm276 = vcmask 15368
    %277 = vst.msk [vmem:[#allocation3] sm:$0xff] %vm276, %v274
    %v278 = vld [vmem:[%s0 + $0x2] sm:$0x1]
    %v279 = vld [vmem:[%s0 + $0xa] sm:$0x1]
    %v280 = vld [vmem:[%s0 + $0x12] sm:$0x1]
    %v281 = vld [vmem:[%s0 + $0x1a] sm:$0x1]
    %v282 = vld [vmem:[%s0 + $0x22] sm:$0x1]
    %v283 = vld [vmem:[%s0 + $0x2a] sm:$0x1]
    %v284 = vld [vmem:[%s0 + $0x32] sm:$0x1]
    %v285 = vld [vmem:[%s0 + $0x3a] sm:$0x1]
    %v294 = vrot.slane %v279, 7
    %v295 = vsel %vm77, %v294, %v278
    %v296 = vrot.slane %v280, 6
    %v297 = vsel %vm80, %v296, %v295
    %v298 = vrot.slane %v281, 5
    %v299 = vsel %vm83, %v298, %v297
    %v300 = vrot.slane %v282, 4
    %v301 = vsel %vm86, %v300, %v299
    %v302 = vrot.slane %v283, 3
    %v303 = vsel %vm89, %v302, %v301
    %v304 = vrot.slane %v284, 2
    %v305 = vsel %vm92, %v304, %v303
    %v306 = vrot.slane %v285, 1
    %v307 = vsel %vm95, %v306, %v305
    %v308 = vsel %vm97, %v307, 0
    %310 = vmatpush.msra.mxu0 0.0
    %311 = vmatpush.msra.mxu0 0.0
    %312 = vmatpush.msra.mxu0 0.0
    %313 = vmatpush.msra.mxu0 0.0
    %314 = vmatpush.msra.mxu0 0.0
    %315 = vmatpush.msra.mxu0 0.0
    %316 = vmatpush.msra.mxu0 0.0
    %317 = vmatpush.msra.mxu0 0.0
    %318 = vmatpush.msra.mxu0 %v36
    %319 = vmatpush.msra.mxu0 %v35
    %320 = vmatpush.msra.mxu0 %v34
    %321 = vmatpush.msra.mxu0 %v33
    %322 = vmatpush.msra.mxu0 %v32
    %323 = vmatpush.msra.mxu0 %v31
    %324 = vmatpush.msra.mxu0 %v30
    %325 = vmatpush.msra.mxu0 %v29
    %326 = vmatmul.f32.gmra.mxu0 %v308
    %v327 = vpop.f32.mrf.mxu0
    %v328 = vadd.f32 %v66, %v327
    %329 = vdwg.mxu0
    %v330 = vmax.f32 %v328, 0.0
    %v331 = vmul.f32 %v229, 0.95
    %v332 = vadd.f32 %v331, %v330
    %v333 = vsub.f32 %v332, %v232
    %vm334 = vcmp.gt.f32.partialorder %v333, 1.0
    %v335 = vsel %vm334, 1, 0
    %v336 = vcvt.s32.f32 %v335
    %337 = vmatpush.msra.mxu0 %v53
    %338 = vmatpush.msra.mxu0 %v52
    %339 = vmatpush.msra.mxu0 %v51
    %340 = vmatpush.msra.mxu0 %v50
    %341 = vmatpush.msra.mxu0 %v49
    %342 = vmatpush.msra.mxu0 %v48
    %343 = vmatpush.msra.mxu0 %v47
    %344 = vmatpush.msra.mxu0 %v46
    %345 = vmatpush.msra.mxu0 %v45
    %346 = vmatpush.msra.mxu0 %v44
    %347 = vmatpush.msra.mxu0 %v43
    %348 = vmatpush.msra.mxu0 %v42
    %349 = vmatpush.msra.mxu0 %v41
    %350 = vmatpush.msra.mxu0 %v40
    %351 = vmatpush.msra.mxu0 %v39
    %352 = vmatpush.msra.mxu0 %v38
    %353 = vmatmul.f32.gmra.mxu0 %v336
    %v354 = vpop.f32.mrf.mxu0
    %v355 = vadd.f32 %v130, %v354
    %356 = vdwg.mxu0
    %v357 = vmax.f32 %v355, 0.0
    %v358 = vmul.f32 %v256, 0.95
    %v359 = vadd.f32 %v358, %v357
    %v360 = vsub.f32 %v359, %v259
    %vm361 = vcmp.gt.f32.partialorder %v360, 1.0
    %v362 = vsel %vm361, 1, 0
    %v363 = vcvt.s32.f32 %v362
    %v364 = vmul.f32 %v363, %v159
    %v365 = vsel %vm97, %v364, 0.0
    %366 = vadd.xlane.f32.xlu0 %v365
    %v367 = vpop.xlane.xlu0 %366
    %v368 = vadd.f32 %v367, %v166
    %v369 = vmax.f32 %v368, 0.0
    %vm370 = vcmp.gt.f32.partialorder %v271, 1.0
    %v371 = vsel %vm370, 1, 0
    %v372 = vcvt.s32.f32 %v371
    %v373 = vmul.f32 %v271, 0.95
    %v374 = vadd.f32 %v373, %v369
    %v375 = vsub.f32 %v374, %v372
    %377 = vrot.lane.b32.xlu0 %v375, 2
    %v378 = vpop.permute.xlu0 %377
    %vm380 = vcmask 23568
    %381 = vst.msk [vmem:[#allocation3] sm:$0xff] %vm380, %v378
    %v382 = vld [vmem:[%s0 + $0x3] sm:$0x1]
    %v383 = vld [vmem:[%s0 + $0xb] sm:$0x1]
    %v384 = vld [vmem:[%s0 + $0x13] sm:$0x1]
    %v385 = vld [vmem:[%s0 + $0x1b] sm:$0x1]
    %v386 = vld [vmem:[%s0 + $0x23] sm:$0x1]
    %v387 = vld [vmem:[%s0 + $0x2b] sm:$0x1]
    %v388 = vld [vmem:[%s0 + $0x33] sm:$0x1]
    %v389 = vld [vmem:[%s0 + $0x3b] sm:$0x1]
    %v398 = vrot.slane %v383, 7
    %v399 = vsel %vm77, %v398, %v382
    %v400 = vrot.slane %v384, 6
    %v401 = vsel %vm80, %v400, %v399
    %v402 = vrot.slane %v385, 5
    %v403 = vsel %vm83, %v402, %v401
    %v404 = vrot.slane %v386, 4
    %v405 = vsel %vm86, %v404, %v403
    %v406 = vrot.slane %v387, 3
    %v407 = vsel %vm89, %v406, %v405
    %v408 = vrot.slane %v388, 2
    %v409 = vsel %vm92, %v408, %v407
    %v410 = vrot.slane %v389, 1
    %v411 = vsel %vm95, %v410, %v409
    %v412 = vsel %vm97, %v411, 0
    %414 = vmatpush.msra.mxu0 0.0
    %415 = vmatpush.msra.mxu0 0.0
    %416 = vmatpush.msra.mxu0 0.0
    %417 = vmatpush.msra.mxu0 0.0
    %418 = vmatpush.msra.mxu0 0.0
    %419 = vmatpush.msra.mxu0 0.0
    %420 = vmatpush.msra.mxu0 0.0
    %421 = vmatpush.msra.mxu0 0.0
    %422 = vmatpush.msra.mxu0 %v36
    %423 = vmatpush.msra.mxu0 %v35
    %424 = vmatpush.msra.mxu0 %v34
    %425 = vmatpush.msra.mxu0 %v33
    %426 = vmatpush.msra.mxu0 %v32
    %427 = vmatpush.msra.mxu0 %v31
    %428 = vmatpush.msra.mxu0 %v30
    %429 = vmatpush.msra.mxu0 %v29
    %430 = vmatmul.f32.gmra.mxu0 %v412
    %v431 = vpop.f32.mrf.mxu0
    %v432 = vadd.f32 %v66, %v431
    %433 = vdwg.mxu0
    %v434 = vmax.f32 %v432, 0.0
    %v435 = vmul.f32 %v333, 0.95
    %v436 = vadd.f32 %v435, %v434
    %v437 = vsub.f32 %v436, %v336
    %vm438 = vcmp.gt.f32.partialorder %v437, 1.0
    %v439 = vsel %vm438, 1, 0
    %v440 = vcvt.s32.f32 %v439
    %441 = vmatpush.msra.mxu0 %v53
    %442 = vmatpush.msra.mxu0 %v52
    %443 = vmatpush.msra.mxu0 %v51
    %444 = vmatpush.msra.mxu0 %v50
    %445 = vmatpush.msra.mxu0 %v49
    %446 = vmatpush.msra.mxu0 %v48
    %447 = vmatpush.msra.mxu0 %v47
    %448 = vmatpush.msra.mxu0 %v46
    %449 = vmatpush.msra.mxu0 %v45
    %450 = vmatpush.msra.mxu0 %v44
    %451 = vmatpush.msra.mxu0 %v43
    %452 = vmatpush.msra.mxu0 %v42
    %453 = vmatpush.msra.mxu0 %v41
    %454 = vmatpush.msra.mxu0 %v40
    %455 = vmatpush.msra.mxu0 %v39
    %456 = vmatpush.msra.mxu0 %v38
    %457 = vmatmul.f32.gmra.mxu0 %v440
    %v458 = vpop.f32.mrf.mxu0
    %v459 = vadd.f32 %v130, %v458
    %460 = vdwg.mxu0
    %v461 = vmax.f32 %v459, 0.0
    %v462 = vmul.f32 %v360, 0.95
    %v463 = vadd.f32 %v462, %v461
    %v464 = vsub.f32 %v463, %v363
    %vm465 = vcmp.gt.f32.partialorder %v464, 1.0
    %v466 = vsel %vm465, 1, 0
    %v467 = vcvt.s32.f32 %v466
    %v468 = vmul.f32 %v467, %v159
    %v469 = vsel %vm97, %v468, 0.0
    %470 = vadd.xlane.f32.xlu0 %v469
    %v471 = vpop.xlane.xlu0 %470
    %v472 = vadd.f32 %v471, %v166
    %v473 = vmax.f32 %v472, 0.0
    %vm474 = vcmp.gt.f32.partialorder %v375, 1.0
    %v475 = vsel %vm474, 1, 0
    %v476 = vcvt.s32.f32 %v475
    %v477 = vmul.f32 %v375, 0.95
    %v478 = vadd.f32 %v477, %v473
    %v479 = vsub.f32 %v478, %v476
    %481 = vrot.lane.b32.xlu0 %v479, 3
    %v482 = vpop.permute.xlu0 %481
    %vm484 = vcmask 31768
    %485 = vst.msk [vmem:[#allocation3] sm:$0xff] %vm484, %v482
    %v486 = vld [vmem:[%s0 + $0x4] sm:$0x1]
    %v487 = vld [vmem:[%s0 + $0xc] sm:$0x1]
    %v488 = vld [vmem:[%s0 + $0x14] sm:$0x1]
    %v489 = vld [vmem:[%s0 + $0x1c] sm:$0x1]
    %v490 = vld [vmem:[%s0 + $0x24] sm:$0x1]
    %v491 = vld [vmem:[%s0 + $0x2c] sm:$0x1]
    %v492 = vld [vmem:[%s0 + $0x34] sm:$0x1]
    %v493 = vld [vmem:[%s0 + $0x3c] sm:$0x1]
    %v502 = vrot.slane %v487, 7
    %v503 = vsel %vm77, %v502, %v486
    %v504 = vrot.slane %v488, 6
    %v505 = vsel %vm80, %v504, %v503
    %v506 = vrot.slane %v489, 5
    %v507 = vsel %vm83, %v506, %v505
    %v508 = vrot.slane %v490, 4
    %v509 = vsel %vm86, %v508, %v507
    %v510 = vrot.slane %v491, 3
    %v511 = vsel %vm89, %v510, %v509
    %v512 = vrot.slane %v492, 2
    %v513 = vsel %vm92, %v512, %v511
    %v514 = vrot.slane %v493, 1
    %v515 = vsel %vm95, %v514, %v513
    %v516 = vsel %vm97, %v515, 0
    %518 = vmatpush.msra.mxu0 0.0
    %519 = vmatpush.msra.mxu0 0.0
    %520 = vmatpush.msra.mxu0 0.0
    %521 = vmatpush.msra.mxu0 0.0
    %522 = vmatpush.msra.mxu0 0.0
    %523 = vmatpush.msra.mxu0 0.0
    %524 = vmatpush.msra.mxu0 0.0
    %525 = vmatpush.msra.mxu0 0.0
    %526 = vmatpush.msra.mxu0 %v36
    %527 = vmatpush.msra.mxu0 %v35
    %528 = vmatpush.msra.mxu0 %v34
    %529 = vmatpush.msra.mxu0 %v33
    %530 = vmatpush.msra.mxu0 %v32
    %531 = vmatpush.msra.mxu0 %v31
    %532 = vmatpush.msra.mxu0 %v30
    %533 = vmatpush.msra.mxu0 %v29
    %534 = vmatmul.f32.gmra.mxu0 %v516
    %v535 = vpop.f32.mrf.mxu0
    %v536 = vadd.f32 %v66, %v535
    %537 = vdwg.mxu0
    %v538 = vmax.f32 %v536, 0.0
    %v539 = vmul.f32 %v437, 0.95
    %v540 = vadd.f32 %v539, %v538
    %v541 = vsub.f32 %v540, %v440
    %vm542 = vcmp.gt.f32.partialorder %v541, 1.0
    %v543 = vsel %vm542, 1, 0
    %v544 = vcvt.s32.f32 %v543
    %545 = vmatpush.msra.mxu0 %v53
    %546 = vmatpush.msra.mxu0 %v52
    %547 = vmatpush.msra.mxu0 %v51
    %548 = vmatpush.msra.mxu0 %v50
    %549 = vmatpush.msra.mxu0 %v49
    %550 = vmatpush.msra.mxu0 %v48
    %551 = vmatpush.msra.mxu0 %v47
    %552 = vmatpush.msra.mxu0 %v46
    %553 = vmatpush.msra.mxu0 %v45
    %554 = vmatpush.msra.mxu0 %v44
    %555 = vmatpush.msra.mxu0 %v43
    %556 = vmatpush.msra.mxu0 %v42
    %557 = vmatpush.msra.mxu0 %v41
    %558 = vmatpush.msra.mxu0 %v40
    %559 = vmatpush.msra.mxu0 %v39
    %560 = vmatpush.msra.mxu0 %v38
    %561 = vmatmul.f32.gmra.mxu0 %v544
    %v562 = vpop.f32.mrf.mxu0
    %v563 = vadd.f32 %v130, %v562
    %564 = vdwg.mxu0
    %v565 = vmax.f32 %v563, 0.0
    %v566 = vmul.f32 %v464, 0.95
    %v567 = vadd.f32 %v566, %v565
    %v568 = vsub.f32 %v567, %v467
    %vm569 = vcmp.gt.f32.partialorder %v568, 1.0
    %v570 = vsel %vm569, 1, 0
    %v571 = vcvt.s32.f32 %v570
    %v572 = vmul.f32 %v571, %v159
    %v573 = vsel %vm97, %v572, 0.0
    %574 = vadd.xlane.f32.xlu0 %v573
    %v575 = vpop.xlane.xlu0 %574
    %v576 = vadd.f32 %v575, %v166
    %v577 = vmax.f32 %v576, 0.0
    %vm578 = vcmp.gt.f32.partialorder %v479, 1.0
    %v579 = vsel %vm578, 1, 0
    %v580 = vcvt.s32.f32 %v579
    %v581 = vmul.f32 %v479, 0.95
    %v582 = vadd.f32 %v581, %v577
    %v583 = vsub.f32 %v582, %v580
    %585 = vrot.lane.b32.xlu0 %v583, 4
    %v586 = vpop.permute.xlu0 %585
    %vm588 = vcmask 39968
    %589 = vst.msk [vmem:[#allocation3] sm:$0xff] %vm588, %v586
    %v590 = vld [vmem:[%s0 + $0x5] sm:$0x1]
    %v591 = vld [vmem:[%s0 + $0xd] sm:$0x1]
    %v592 = vld [vmem:[%s0 + $0x15] sm:$0x1]
    %v593 = vld [vmem:[%s0 + $0x1d] sm:$0x1]
    %v594 = vld [vmem:[%s0 + $0x25] sm:$0x1]
    %v595 = vld [vmem:[%s0 + $0x2d] sm:$0x1]
    %v596 = vld [vmem:[%s0 + $0x35] sm:$0x1]
    %v597 = vld [vmem:[%s0 + $0x3d] sm:$0x1]
    %v606 = vrot.slane %v591, 7
    %v607 = vsel %vm77, %v606, %v590
    %v608 = vrot.slane %v592, 6
    %v609 = vsel %vm80, %v608, %v607
    %v610 = vrot.slane %v593, 5
    %v611 = vsel %vm83, %v610, %v609
    %v612 = vrot.slane %v594, 4
    %v613 = vsel %vm86, %v612, %v611
    %v614 = vrot.slane %v595, 3
    %v615 = vsel %vm89, %v614, %v613
    %v616 = vrot.slane %v596, 2
    %v617 = vsel %vm92, %v616, %v615
    %v618 = vrot.slane %v597, 1
    %v619 = vsel %vm95, %v618, %v617
    %v620 = vsel %vm97, %v619, 0
    %622 = vmatpush.msra.mxu0 0.0
    %623 = vmatpush.msra.mxu0 0.0
    %624 = vmatpush.msra.mxu0 0.0
    %625 = vmatpush.msra.mxu0 0.0
    %626 = vmatpush.msra.mxu0 0.0
    %627 = vmatpush.msra.mxu0 0.0
    %628 = vmatpush.msra.mxu0 0.0
    %629 = vmatpush.msra.mxu0 0.0
    %630 = vmatpush.msra.mxu0 %v36
    %631 = vmatpush.msra.mxu0 %v35
    %632 = vmatpush.msra.mxu0 %v34
    %633 = vmatpush.msra.mxu0 %v33
    %634 = vmatpush.msra.mxu0 %v32
    %635 = vmatpush.msra.mxu0 %v31
    %636 = vmatpush.msra.mxu0 %v30
    %637 = vmatpush.msra.mxu0 %v29
    %638 = vmatmul.f32.gmra.mxu0 %v620
    %v639 = vpop.f32.mrf.mxu0
    %v640 = vadd.f32 %v66, %v639
    %641 = vdwg.mxu0
    %v642 = vmax.f32 %v640, 0.0
    %v643 = vmul.f32 %v541, 0.95
    %v644 = vadd.f32 %v643, %v642
    %v645 = vsub.f32 %v644, %v544
    %vm646 = vcmp.gt.f32.partialorder %v645, 1.0
    %v647 = vsel %vm646, 1, 0
    %v648 = vcvt.s32.f32 %v647
    %649 = vmatpush.msra.mxu0 %v53
    %650 = vmatpush.msra.mxu0 %v52
    %651 = vmatpush.msra.mxu0 %v51
    %652 = vmatpush.msra.mxu0 %v50
    %653 = vmatpush.msra.mxu0 %v49
    %654 = vmatpush.msra.mxu0 %v48
    %655 = vmatpush.msra.mxu0 %v47
    %656 = vmatpush.msra.mxu0 %v46
    %657 = vmatpush.msra.mxu0 %v45
    %658 = vmatpush.msra.mxu0 %v44
    %659 = vmatpush.msra.mxu0 %v43
    %660 = vmatpush.msra.mxu0 %v42
    %661 = vmatpush.msra.mxu0 %v41
    %662 = vmatpush.msra.mxu0 %v40
    %663 = vmatpush.msra.mxu0 %v39
    %664 = vmatpush.msra.mxu0 %v38
    %665 = vmatmul.f32.gmra.mxu0 %v648
    %v666 = vpop.f32.mrf.mxu0
    %v667 = vadd.f32 %v130, %v666
    %668 = vdwg.mxu0
    %v669 = vmax.f32 %v667, 0.0
    %v670 = vmul.f32 %v568, 0.95
    %v671 = vadd.f32 %v670, %v669
    %v672 = vsub.f32 %v671, %v571
    %vm673 = vcmp.gt.f32.partialorder %v672, 1.0
    %v674 = vsel %vm673, 1, 0
    %v675 = vcvt.s32.f32 %v674
    %v676 = vmul.f32 %v675, %v159
    %v677 = vsel %vm97, %v676, 0.0
    %678 = vadd.xlane.f32.xlu0 %v677
    %v679 = vpop.xlane.xlu0 %678
    %v680 = vadd.f32 %v679, %v166
    %v681 = vmax.f32 %v680, 0.0
    %vm682 = vcmp.gt.f32.partialorder %v583, 1.0
    %v683 = vsel %vm682, 1, 0
    %v684 = vcvt.s32.f32 %v683
    %v685 = vmul.f32 %v583, 0.95
    %v686 = vadd.f32 %v685, %v681
    %v687 = vsub.f32 %v686, %v684
    %689 = vrot.lane.b32.xlu0 %v687, 5
    %v690 = vpop.permute.xlu0 %689
    %vm692 = vcmask 48168
    %693 = vst.msk [vmem:[#allocation3] sm:$0xff] %vm692, %v690
    %v694 = vld [vmem:[%s0 + $0x6] sm:$0x1]
    %v695 = vld [vmem:[%s0 + $0xe] sm:$0x1]
    %v696 = vld [vmem:[%s0 + $0x16] sm:$0x1]
    %v697 = vld [vmem:[%s0 + $0x1e] sm:$0x1]
    %v698 = vld [vmem:[%s0 + $0x26] sm:$0x1]
    %v699 = vld [vmem:[%s0 + $0x2e] sm:$0x1]
    %v700 = vld [vmem:[%s0 + $0x36] sm:$0x1]
    %v701 = vld [vmem:[%s0 + $0x3e] sm:$0x1]
    %v710 = vrot.slane %v695, 7
    %v711 = vsel %vm77, %v710, %v694
    %v712 = vrot.slane %v696, 6
    %v713 = vsel %vm80, %v712, %v711
    %v714 = vrot.slane %v697, 5
    %v715 = vsel %vm83, %v714, %v713
    %v716 = vrot.slane %v698, 4
    %v717 = vsel %vm86, %v716, %v715
    %v718 = vrot.slane %v699, 3
    %v719 = vsel %vm89, %v718, %v717
    %v720 = vrot.slane %v700, 2
    %v721 = vsel %vm92, %v720, %v719
    %v722 = vrot.slane %v701, 1
    %v723 = vsel %vm95, %v722, %v721
    %v724 = vsel %vm97, %v723, 0
    %726 = vmatpush.msra.mxu0 0.0
    %727 = vmatpush.msra.mxu0 0.0
    %728 = vmatpush.msra.mxu0 0.0
    %729 = vmatpush.msra.mxu0 0.0
    %730 = vmatpush.msra.mxu0 0.0
    %731 = vmatpush.msra.mxu0 0.0
    %732 = vmatpush.msra.mxu0 0.0
    %733 = vmatpush.msra.mxu0 0.0
    %734 = vmatpush.msra.mxu0 %v36
    %735 = vmatpush.msra.mxu0 %v35
    %736 = vmatpush.msra.mxu0 %v34
    %737 = vmatpush.msra.mxu0 %v33
    %738 = vmatpush.msra.mxu0 %v32
    %739 = vmatpush.msra.mxu0 %v31
    %740 = vmatpush.msra.mxu0 %v30
    %741 = vmatpush.msra.mxu0 %v29
    %742 = vmatmul.f32.gmra.mxu0 %v724
    %v743 = vpop.f32.mrf.mxu0
    %v744 = vadd.f32 %v66, %v743
    %745 = vdwg.mxu0
    %v746 = vmax.f32 %v744, 0.0
    %v747 = vmul.f32 %v645, 0.95
    %v748 = vadd.f32 %v747, %v746
    %v749 = vsub.f32 %v748, %v648
    %vm750 = vcmp.gt.f32.partialorder %v749, 1.0
    %v751 = vsel %vm750, 1, 0
    %v752 = vcvt.s32.f32 %v751
    %753 = vmatpush.msra.mxu0 %v53
    %754 = vmatpush.msra.mxu0 %v52
    %755 = vmatpush.msra.mxu0 %v51
    %756 = vmatpush.msra.mxu0 %v50
    %757 = vmatpush.msra.mxu0 %v49
    %758 = vmatpush.msra.mxu0 %v48
    %759 = vmatpush.msra.mxu0 %v47
    %760 = vmatpush.msra.mxu0 %v46
    %761 = vmatpush.msra.mxu0 %v45
    %762 = vmatpush.msra.mxu0 %v44
    %763 = vmatpush.msra.mxu0 %v43
    %764 = vmatpush.msra.mxu0 %v42
    %765 = vmatpush.msra.mxu0 %v41
    %766 = vmatpush.msra.mxu0 %v40
    %767 = vmatpush.msra.mxu0 %v39
    %768 = vmatpush.msra.mxu0 %v38
    %769 = vmatmul.f32.gmra.mxu0 %v752
    %v770 = vpop.f32.mrf.mxu0
    %v771 = vadd.f32 %v130, %v770
    %772 = vdwg.mxu0
    %v773 = vmax.f32 %v771, 0.0
    %v774 = vmul.f32 %v672, 0.95
    %v775 = vadd.f32 %v774, %v773
    %v776 = vsub.f32 %v775, %v675
    %vm777 = vcmp.gt.f32.partialorder %v776, 1.0
    %v778 = vsel %vm777, 1, 0
    %v779 = vcvt.s32.f32 %v778
    %v780 = vmul.f32 %v779, %v159
    %v781 = vsel %vm97, %v780, 0.0
    %782 = vadd.xlane.f32.xlu0 %v781
    %v783 = vpop.xlane.xlu0 %782
    %v784 = vadd.f32 %v783, %v166
    %v785 = vmax.f32 %v784, 0.0
    %vm786 = vcmp.gt.f32.partialorder %v687, 1.0
    %v787 = vsel %vm786, 1, 0
    %v788 = vcvt.s32.f32 %v787
    %v789 = vmul.f32 %v687, 0.95
    %v790 = vadd.f32 %v789, %v785
    %v791 = vsub.f32 %v790, %v788
    %793 = vrot.lane.b32.xlu0 %v791, 6
    %v794 = vpop.permute.xlu0 %793
    %vm796 = vcmask 56368
    %797 = vst.msk [vmem:[#allocation3] sm:$0xff] %vm796, %v794
    %v798 = vld [vmem:[%s0 + $0x7] sm:$0x1]
    %v799 = vld [vmem:[%s0 + $0xf] sm:$0x1]
    %v800 = vld [vmem:[%s0 + $0x17] sm:$0x1]
    %v801 = vld [vmem:[%s0 + $0x1f] sm:$0x1]
    %v802 = vld [vmem:[%s0 + $0x27] sm:$0x1]
    %v803 = vld [vmem:[%s0 + $0x2f] sm:$0x1]
    %v804 = vld [vmem:[%s0 + $0x37] sm:$0x1]
    %v805 = vld [vmem:[%s0 + $0x3f] sm:$0x1]
    %v814 = vrot.slane %v799, 7
    %v815 = vsel %vm77, %v814, %v798
    %v816 = vrot.slane %v800, 6
    %v817 = vsel %vm80, %v816, %v815
    %v818 = vrot.slane %v801, 5
    %v819 = vsel %vm83, %v818, %v817
    %v820 = vrot.slane %v802, 4
    %v821 = vsel %vm86, %v820, %v819
    %v822 = vrot.slane %v803, 3
    %v823 = vsel %vm89, %v822, %v821
    %v824 = vrot.slane %v804, 2
    %v825 = vsel %vm92, %v824, %v823
    %v826 = vrot.slane %v805, 1
    %v827 = vsel %vm95, %v826, %v825
    %v828 = vsel %vm97, %v827, 0
    %830 = vmatpush.msra.mxu0 0.0
    %831 = vmatpush.msra.mxu0 0.0
    %832 = vmatpush.msra.mxu0 0.0
    %833 = vmatpush.msra.mxu0 0.0
    %834 = vmatpush.msra.mxu0 0.0
    %835 = vmatpush.msra.mxu0 0.0
    %836 = vmatpush.msra.mxu0 0.0
    %837 = vmatpush.msra.mxu0 0.0
    %838 = vmatpush.msra.mxu0 %v36
    %839 = vmatpush.msra.mxu0 %v35
    %840 = vmatpush.msra.mxu0 %v34
    %841 = vmatpush.msra.mxu0 %v33
    %842 = vmatpush.msra.mxu0 %v32
    %843 = vmatpush.msra.mxu0 %v31
    %844 = vmatpush.msra.mxu0 %v30
    %845 = vmatpush.msra.mxu0 %v29
    %846 = vmatmul.f32.gmra.mxu0 %v828
    %v847 = vpop.f32.mrf.mxu0
    %v848 = vadd.f32 %v66, %v847
    %849 = vdwg.mxu0
    %v850 = vmax.f32 %v848, 0.0
    %v851 = vmul.f32 %v749, 0.95
    %v852 = vadd.f32 %v851, %v850
    %v853 = vsub.f32 %v852, %v752
    %vm854 = vcmp.gt.f32.partialorder %v853, 1.0
    %v855 = vsel %vm854, 1, 0
    %v856 = vcvt.s32.f32 %v855
    %857 = vmatpush.msra.mxu0 %v53
    %858 = vmatpush.msra.mxu0 %v52
    %859 = vmatpush.msra.mxu0 %v51
    %860 = vmatpush.msra.mxu0 %v50
    %861 = vmatpush.msra.mxu0 %v49
    %862 = vmatpush.msra.mxu0 %v48
    %863 = vmatpush.msra.mxu0 %v47
    %864 = vmatpush.msra.mxu0 %v46
    %865 = vmatpush.msra.mxu0 %v45
    %866 = vmatpush.msra.mxu0 %v44
    %867 = vmatpush.msra.mxu0 %v43
    %868 = vmatpush.msra.mxu0 %v42
    %869 = vmatpush.msra.mxu0 %v41
    %870 = vmatpush.msra.mxu0 %v40
    %871 = vmatpush.msra.mxu0 %v39
    %872 = vmatpush.msra.mxu0 %v38
    %873 = vmatmul.f32.gmra.mxu0 %v856
    %v874 = vpop.f32.mrf.mxu0
    %v875 = vadd.f32 %v130, %v874
    %876 = vdwg.mxu0
    %v877 = vmax.f32 %v875, 0.0
    %v878 = vmul.f32 %v776, 0.95
    %v879 = vadd.f32 %v878, %v877
    %v880 = vsub.f32 %v879, %v779
    %vm881 = vcmp.gt.f32.partialorder %v880, 1.0
    %v882 = vsel %vm881, 1, 0
    %v883 = vcvt.s32.f32 %v882
    %v884 = vmul.f32 %v883, %v159
    %v885 = vsel %vm97, %v884, 0.0
    %886 = vadd.xlane.f32.xlu0 %v885
    %v887 = vpop.xlane.xlu0 %886
    %v888 = vadd.f32 %v887, %v166
    %v889 = vmax.f32 %v888, 0.0
    %vm890 = vcmp.gt.f32.partialorder %v791, 1.0
    %v891 = vsel %vm890, 1, 0
    %v892 = vcvt.s32.f32 %v891
    %v893 = vmul.f32 %v791, 0.95
    %v894 = vadd.f32 %v893, %v889
    %v895 = vsub.f32 %v894, %v892
    %897 = vrot.lane.b32.xlu0 %v895, 7
    %v898 = vpop.permute.xlu0 %897
    %vm900 = vcmask 64568
    %901 = vst.msk [vmem:[#allocation3] sm:$0xff] %vm900, %v898
    // Predicated region
    $region30: #{tpu_custom_call.1} parent=1 // pred_check
      _
    $region31: #{tpu_custom_call.1} parent=1 // pred_check_branch
      %903 = sbr.rel (0) target = $region33
    $region32: #{tpu_custom_call.1} parent=1 // pred_region
      %905 = vsyncadd [#allocation4], 0
      %s907 = sshll.u32 [#allocation3], 4
      %s908 = int_to_ptr.vmem [resolvable:$true] %s907
      %s909 = sshll.u32 %s7, 4
      %s910 = int_to_ptr.hbm [resolvable:$true] %s909
      %912 = dma.vmem_to_hbm [thread:$0]  %s908, 128, %s910, [#allocation4]
    $region33: #{tpu_custom_call.1} parent=1 // pred_fallthru
      _
    // Predicated region
    $region34: #{tpu_custom_call.1} parent=1 // pred_check
      _
    $region35: #{tpu_custom_call.1} parent=1 // pred_check_branch
      %914 = sbr.rel (0) target = $region37
    $region36: #{tpu_custom_call.1} parent=1 // pred_region
      %916 = dma.done [#allocation4], 128
    $region37: #{tpu_custom_call.1} parent=1 // pred_fallthru
      _
    %917 = vsyncpa [#allocation4], 1

</llo_original>
